<compile_context>
chip_gen: v7x
topology: tpu7x:2x2x1
jax: 0.10.0
libtpu: 0.0.40
codegen_flags: <defaults>
</compile_context>

<pallas_src>
import jax
import jax.numpy as jnp
from jax.experimental import pallas as pl
from jax.experimental.pallas import tpu as pltpu

H = 32            # args['hidden_size']
LANES = 128       # padded feature width -> lane-dense vregs / stores
BN_EPS = 1.0      # torch.nn.BatchNorm1d(hidden_size, eps=1)
NEG_SLOPE = 0.01  # nn.LeakyReLU() default negative_slope

_VMEM = pl.BlockSpec(memory_space=pltpu.MemorySpace.VMEM)


# ------------------------------ static plan -----------------------------------

def _build_plan(node_types, node_counts, msg_types, e_total):
    """All-static row offsets for the host-packed slabs (node counts are multiples of 16 so
    every bf16 in-kernel slice / matmul operand is tile-aligned)."""
    node_off, off = {}, 0
    for nt in node_types:
        node_off[nt] = off
        off += node_counts[nt]
    n_total = off
    adj_off, off = {}, 0
    for mt in msg_types:
        adj_off[mt] = off
        off += node_counts[mt[2]]
    d_total = off
    dst_groups = {nt: tuple(mt for mt in msg_types if mt[2] == nt) for nt in node_types}
    msg_index = {mt: i for i, mt in enumerate(msg_types)}
    wupd_off, off = {}, 0
    for layer in range(2):
        for nt in node_types:
            if dst_groups[nt]:
                wupd_off[(layer, nt)] = off
                off += len(dst_groups[nt]) * LANES
    e_pad = max(16, -(-e_total // 16) * 16)
    return dict(node_types=tuple(node_types), node_counts=dict(node_counts),
                node_off=node_off, n_total=n_total, msg_types=tuple(msg_types),
                adj_off=adj_off, d_total=d_total, dst_groups=dst_groups,
                msg_index=msg_index, wupd_off=wupd_off, e_total=e_total, e_pad=e_pad)


# ----------------------------- fused Pallas kernel ----------------------------

def _bn_leaky_relu(x, gamma, beta):
    """Training-mode BatchNorm1d (biased batch stats, eps=1) + LeakyReLU, all f32.
    gamma/beta are zero in padded lanes, so padded columns stay exactly zero."""
    mean = jnp.mean(x, axis=0, keepdims=True)
    var = jnp.mean(jnp.square(x - mean), axis=0, keepdims=True)
    y = gamma * (x - mean) * jax.lax.rsqrt(var + BN_EPS) + beta
    return jnp.where(y > 0, y, NEG_SLOPE * y)


def _make_kernel(plan):
    node_types = plan['node_types']
    node_counts = plan['node_counts']
    node_off = plan['node_off']
    msg_types = plan['msg_types']
    adj_off = plan['adj_off']
    dst_groups = plan['dst_groups']
    msg_index = plan['msg_index']
    wupd_off = plan['wupd_off']
    n_mt, n_nt, e_pad = len(msg_types), len(node_types), plan['e_pad']
    bf16 = jnp.bfloat16

    def kernel(x_ref, adj_ref, wmsg_ref, wupd_ref, bn_ref, sel_ref, out_ref):
        # Activations live in bf16 between stages (casts hoisted); MXU accumulation is f32.
        h = {nt: x_ref[node_off[nt]:node_off[nt] + node_counts[nt], :]
             for nt in node_types}
        a_slab = adj_ref[...]                                   # (D_total, N_total) bf16

        for layer in range(2):
            # --- message_and_aggregate (mean) for ALL message types in ONE matmul ---
            x_all = x_ref[...] if layer == 0 else jnp.concatenate(
                [h[nt] for nt in node_types], axis=0)           # (N_total, 128) bf16
            aggr_all = jnp.dot(a_slab, x_all,
                               preferred_element_type=jnp.float32).astype(bf16)

            new_h = {}
            for nt in node_types:
                mts = dst_groups[nt]
                if not mts:
                    new_h[nt] = h[nt]   # carry forward types with no incoming message type
                    continue
                x_dst = h[nt]
                full_msgs = []
                for mt in mts:
                    r0 = adj_off[mt]
                    aggr = aggr_all[r0:r0 + node_counts[nt], :]
                    w0 = (layer * n_mt + msg_index[mt]) * 2 * LANES
                    w_msg = wmsg_ref[w0:w0 + 2 * LANES, :]
                    # fused lin_dst + lin_src: single K=256 contraction; conv biases dropped
                    # (exactly cancelled by the train-mode BatchNorm mean subtraction).
                    fm = jnp.dot(jnp.concatenate([x_dst, aggr], axis=-1), w_msg,
                                 preferred_element_type=jnp.float32)
                    full_msgs.append(fm.astype(bf16))
                stacked = (full_msgs[0] if len(full_msgs) == 1
                           else jnp.concatenate(full_msgs, axis=-1))
                u0 = wupd_off[(layer, nt)]
                w_upd = wupd_ref[u0:u0 + len(mts) * LANES, :]
                # fused lin_update across message types; cross-message 1/k mean folded into w.
                agg = jnp.dot(stacked, w_upd, preferred_element_type=jnp.float32)
                b0 = (layer * n_nt + node_types.index(nt)) * 2
                gamma = bn_ref[b0:b0 + 1, :]
                beta = bn_ref[b0 + 1:b0 + 2, :]
                new_h[nt] = _bn_leaky_relu(agg, gamma, beta).astype(bf16)
            h = new_h

        # --- edge head: index_select via bf16 one-hot matmuls (MXU), f32 accumulation ---
        xl = h['n1']
        nodes_first = jnp.dot(sel_ref[0:e_pad, :], xl,
                              preferred_element_type=jnp.float32)
        nodes_second = jnp.dot(sel_ref[e_pad:2 * e_pad, :], xl,
                               preferred_element_type=jnp.float32)
        score = jnp.sum(nodes_first * nodes_second, axis=-1, keepdims=True)
        out_ref[...] = jnp.broadcast_to(score, out_ref.shape)   # lane-dense, unmasked store

    return kernel


# ------------------------------ forward wrapper --------------------------------

def make_forward(plan, label_counts):
    """Whole HeteroGNN.forward in one pallas_call; only glue (one-hot build, output split)
    stays in XLA."""
    kernel = _make_kernel(plan)
    e_pad, e_total = plan['e_pad'], plan['e_total']
    n1 = plan['node_counts']['n1']
    label_keys = tuple(label_counts.keys())
    counts = tuple(label_counts[k] for k in label_keys)

    @jax.jit
    def forward(x_slab, adj_slab, w_msg_slab, w_upd_slab, bn_slab, edge_label_index):
        idx_first = jnp.concatenate([edge_label_index[k][0] for k in label_keys])
        idx_second = jnp.concatenate([edge_label_index[k][1] for k in label_keys])
        if e_pad != e_total:
            pad = jnp.zeros((e_pad - e_total,), idx_first.dtype)
            idx_first = jnp.concatenate([idx_first, pad])
            idx_second = jnp.concatenate([idx_second, pad])
        # 0/1 values are exact in bf16; halves sel VMEM/DMA bytes vs f32.
        sel = jax.nn.one_hot(jnp.concatenate([idx_first, idx_second]), n1,
                             dtype=jnp.bfloat16)
        out = pl.pallas_call(
            kernel,
            out_shape=jax.ShapeDtypeStruct((e_pad, LANES), jnp.float32),
            in_specs=[_VMEM] * 6,
            out_specs=_VMEM,
        )(x_slab, adj_slab, w_msg_slab, w_upd_slab, bn_slab, sel)
        scores = out[:, 0]
        pred, off = {}, 0
        for k, n in zip(label_keys, counts):
            pred[k] = scores[off:off + n]
            off += n
        return pred

    return forward


# ------------------------------ parameter packing -------------------------------

def init_conv_params(key, f_src, f_dst, h):
    """nn.Linear-style init (U(+-1/sqrt(fan_in))); weights stored [in, out] (y = x @ W + b).
    Biases are generated for parameter fidelity but never fed to the kernel: under
    training-mode BatchNorm the per-column constants they add are exactly cancelled."""
    def lin(k, fin, fout):
        bound = 1.0 / (fin ** 0.5)
        kw, kb = jax.random.split(k)
        return (jax.random.uniform(kw, (fin, fout), jnp.float32, -bound, bound),
                jax.random.uniform(kb, (fout,), jnp.float32, -bound, bound))
    k0, k1, k2 = jax.random.split(key, 3)
    w_dst, b_dst = lin(k0, f_dst, h)
    w_src, b_src = lin(k1, f_src, h)
    w_upd, b_upd = lin(k2, 2 * h, h)
    return dict(w_dst=w_dst, b_dst=b_dst, w_src=w_src, b_src=b_src,
                w_upd=w_upd, b_upd=b_upd)


def pack_msg_weights(conv_params_per_layer, plan):
    """Per (layer, msg type): one (2*LANES, LANES) bf16 block; [x_dst | aggr] @ block yields
    concat(lin_dst(x_dst), lin_src(aggr)) in columns [0, 2H) (torch.concat lives in layout)."""
    blocks = []
    for layer_params in conv_params_per_layer:
        for mt in plan['msg_types']:
            p = layer_params[mt]
            w = jnp.zeros((2 * LANES, LANES), jnp.float32)
            w = w.at[:p['w_dst'].shape[0], :H].set(p['w_dst'])
            w = w.at[LANES:LANES + p['w_src'].shape[0], H:2 * H].set(p['w_src'])
            blocks.append(w)
    return jnp.concatenate(blocks, axis=0).astype(jnp.bfloat16)


def pack_upd_weights(conv_params_per_layer, plan):
    """Per (layer, dst type): the group's lin_update blocks stacked along K with the
    cross-message-type 1/len mean folded into the weights."""
    blocks = []
    for layer_params in conv_params_per_layer:
        for nt in plan['node_types']:
            mts = plan['dst_groups'][nt]
            if not mts:
                continue
            w = jnp.zeros((len(mts) * LANES, LANES), jnp.float32)
            for j, mt in enumerate(mts):
                w = w.at[j * LANES:j * LANES + 2 * H, :H].set(
                    layer_params[mt]['w_upd'] / len(mts))
            blocks.append(w)
    return jnp.concatenate(blocks, axis=0).astype(jnp.bfloat16)


def pack_bn_params(bn_params_per_layer, plan):
    rows = []
    for layer_params in bn_params_per_layer:
        for nt in plan['node_types']:
            rows.append(jnp.zeros((LANES,), jnp.float32).at[:H].set(layer_params[nt]['gamma']))
            rows.append(jnp.zeros((LANES,), jnp.float32).at[:H].set(layer_params[nt]['beta']))
    return jnp.stack(rows)                          # (2 * 2 * n_node_types, 128) f32


def pack_node_features(node_features, plan):
    mats = []
    for nt in plan['node_types']:
        x = node_features[nt]
        mats.append(jnp.pad(x, ((0, 0), (0, LANES - x.shape[1]))))
    return jnp.concatenate(mats, axis=0).astype(jnp.bfloat16)


def pack_adjacency(edge_indices, plan):
    """Dense row-mean-normalised adjacency (stand-in for torch_sparse matmul reduce='mean'),
    built over the FULL node-slab columns and stacked by message type so one matmul
    aggregates every message type at once."""
    blocks = []
    for mt in plan['msg_types']:
        src_t, _, dst_t = mt
        src = edge_indices[mt][0] + plan['node_off'][src_t]
        dst = edge_indices[mt][1]
        a = jnp.zeros((plan['node_counts'][dst_t], plan['n_total']),
                      jnp.float32).at[dst, src].add(1.0)
        deg = a.sum(axis=1, keepdims=True)
        blocks.append(a / jnp.maximum(deg, 1.0))    # zero-degree dst rows stay 0
    return jnp.concatenate(blocks, axis=0).astype(jnp.bfloat16)


# --------------------------------- main ----------------------------------------

if __name__ == "__main__":
    key = jax.random.PRNGKey(0)
    keys = jax.random.split(key, 12)

    # Small deterministic heterogeneous graph; node-row counts are multiples of 16 so every
    # bf16 static slice / matmul operand is tile-aligned.
    node_types = ('n1', 'n2')
    msg_types = (('n1', 'e1', 'n1'), ('n2', 'e2', 'n1'), ('n1', 'e3', 'n2'))
    node_counts = {'n1': 32, 'n2': 48}
    feat_dims = {'n1': 16, 'n2': 8}

    node_features = {
        'n1': jax.random.normal(keys[0], (node_counts['n1'], feat_dims['n1']), jnp.float32),
        'n2': jax.random.normal(keys[1], (node_counts['n2'], feat_dims['n2']), jnp.float32),
    }

    E = 64
    edge_indices = {}
    for i, mt in enumerate(msg_types):
        src_t, _, dst_t = mt
        ks, kd = jax.random.split(keys[2 + i])
        edge_indices[mt] = jnp.stack([
            jax.random.randint(ks, (E,), 0, node_counts[src_t]),
            jax.random.randint(kd, (E,), 0, node_counts[dst_t]),
        ])

    E_label = 40
    kl1, kl2 = jax.random.split(keys[6])
    edge_label_index = {
        ('n1', 'e1', 'n1'): jnp.stack([
            jax.random.randint(kl1, (E_label,), 0, node_counts['n1']),
            jax.random.randint(kl2, (E_label,), 0, node_counts['n1']),
        ])
    }
    label_counts = {k: int(v.shape[1]) for k, v in edge_label_index.items()}

    plan = _build_plan(node_types, node_counts, msg_types, sum(label_counts.values()))

    pkeys = jax.random.split(keys[7], 2 * len(msg_types))
    convs1 = {mt: init_conv_params(pkeys[i], feat_dims[mt[0]], feat_dims[mt[2]], H)
              for i, mt in enumerate(msg_types)}
    convs2 = {mt: init_conv_params(pkeys[len(msg_types) + i], H, H, H)
              for i, mt in enumerate(msg_types)}
    bns = tuple({nt: dict(gamma=jnp.ones((H,), jnp.float32),
                          beta=jnp.zeros((H,), jnp.float32)) for nt in node_types}
                for _ in range(2))

    # Host-packed slabs: 6 DMAs instead of ~40 tiny per-tensor transfers.
    x_slab = pack_node_features(node_features, plan)
    adj_slab = pack_adjacency(edge_indices, plan)
    w_msg_slab = pack_msg_weights((convs1, convs2), plan)
    w_upd_slab = pack_upd_weights((convs1, convs2), plan)
    bn_slab = pack_bn_params(bns, plan)

    # TODO(synk): loss() (BCEWithLogits over sigmoid(pred)) is training-only, not part of forward.
    forward = make_forward(plan, label_counts)
    pred = forward(x_slab, adj_slab, w_msg_slab, w_upd_slab, bn_slab, edge_label_index)
    jax.block_until_ready(pred)
    print("KERNEL_OK")
</pallas_src>

<mosaic_0001>
module attributes {stable_mosaic.version = 11 : i64} {
  func.func @kernel(%arg0: memref<80x128xbf16, #tpu.memory_space<vmem>>, %arg1: memref<112x80xbf16, #tpu.memory_space<vmem>>, %arg2: memref<1536x128xbf16, #tpu.memory_space<vmem>>, %arg3: memref<768x128xbf16, #tpu.memory_space<vmem>>, %arg4: memref<8x128xf32, #tpu.memory_space<vmem>>, %arg5: memref<96x32xbf16, #tpu.memory_space<vmem>>, %arg6: memref<48x128xf32, #tpu.memory_space<vmem>>) attributes {dimension_semantics = [], scalar_prefetch = 0 : i64, scratch_operands = 0 : i64, tpu.core_type = #tpu.core_type<tc>} {
    %c0 = arith.constant 0 : index
    %c0_0 = arith.constant 0 : index
    %0 = vector.load %arg0[%c0, %c0_0] : memref<80x128xbf16, #tpu.memory_space<vmem>>, vector<32x128xbf16>
    %c32 = arith.constant 32 : index
    %c0_1 = arith.constant 0 : index
    %1 = vector.load %arg0[%c32, %c0_1] : memref<80x128xbf16, #tpu.memory_space<vmem>>, vector<48x128xbf16>
    %c0_2 = arith.constant 0 : index
    %c0_3 = arith.constant 0 : index
    %2 = vector.load %arg1[%c0_2, %c0_3] : memref<112x80xbf16, #tpu.memory_space<vmem>>, vector<112x80xbf16>
    %c0_4 = arith.constant 0 : index
    %c0_5 = arith.constant 0 : index
    %3 = vector.load %arg0[%c0_4, %c0_5] : memref<80x128xbf16, #tpu.memory_space<vmem>>, vector<80x128xbf16>
    %cst = arith.constant dense<0.000000e+00> : vector<112x128xf32>
    %4 = tpu.matmul %2, %3, %cst {dimension_numbers = #tpu.dot_dimension_numbers<[1], [0], [0], [1], [0, 0, 1, 1], [], []>} : vector<112x80xbf16>, vector<80x128xbf16>, vector<112x128xf32> -> vector<112x128xf32>
    %5 = arith.truncf %4 : vector<112x128xf32> to vector<112x128xbf16>
    %6 = vector.extract_strided_slice %5 {offsets = [0, 0], sizes = [32, 128], strides = [1, 1]} : vector<112x128xbf16> to vector<32x128xbf16>
    %c0_6 = arith.constant 0 : index
    %c0_7 = arith.constant 0 : index
    %7 = vector.load %arg2[%c0_6, %c0_7] : memref<1536x128xbf16, #tpu.memory_space<vmem>>, vector<256x128xbf16>
    %8 = tpu.concatenate %0, %6 in 1 : vector<32x128xbf16>, vector<32x128xbf16> -> vector<32x256xbf16>
    %cst_8 = arith.constant dense<0.000000e+00> : vector<32x128xf32>
    %9 = tpu.matmul %8, %7, %cst_8 {dimension_numbers = #tpu.dot_dimension_numbers<[1], [0], [0], [1], [0, 0, 1, 1], [], []>} : vector<32x256xbf16>, vector<256x128xbf16>, vector<32x128xf32> -> vector<32x128xf32>
    %10 = arith.truncf %9 : vector<32x128xf32> to vector<32x128xbf16>
    %11 = vector.extract_strided_slice %5 {offsets = [32, 0], sizes = [32, 128], strides = [1, 1]} : vector<112x128xbf16> to vector<32x128xbf16>
    %c256 = arith.constant 256 : index
    %c0_9 = arith.constant 0 : index
    %12 = vector.load %arg2[%c256, %c0_9] : memref<1536x128xbf16, #tpu.memory_space<vmem>>, vector<256x128xbf16>
    %13 = tpu.concatenate %0, %11 in 1 : vector<32x128xbf16>, vector<32x128xbf16> -> vector<32x256xbf16>
    %cst_10 = arith.constant dense<0.000000e+00> : vector<32x128xf32>
    %14 = tpu.matmul %13, %12, %cst_10 {dimension_numbers = #tpu.dot_dimension_numbers<[1], [0], [0], [1], [0, 0, 1, 1], [], []>} : vector<32x256xbf16>, vector<256x128xbf16>, vector<32x128xf32> -> vector<32x128xf32>
    %15 = arith.truncf %14 : vector<32x128xf32> to vector<32x128xbf16>
    %16 = tpu.concatenate %10, %15 in 1 : vector<32x128xbf16>, vector<32x128xbf16> -> vector<32x256xbf16>
    %c0_11 = arith.constant 0 : index
    %c0_12 = arith.constant 0 : index
    %17 = vector.load %arg3[%c0_11, %c0_12] : memref<768x128xbf16, #tpu.memory_space<vmem>>, vector<256x128xbf16>
    %cst_13 = arith.constant dense<0.000000e+00> : vector<32x128xf32>
    %18 = tpu.matmul %16, %17, %cst_13 {dimension_numbers = #tpu.dot_dimension_numbers<[1], [0], [0], [1], [0, 0, 1, 1], [], []>} : vector<32x256xbf16>, vector<256x128xbf16>, vector<32x128xf32> -> vector<32x128xf32>
    %c0_14 = arith.constant 0 : index
    %c0_15 = arith.constant 0 : index
    %19 = vector.load %arg4[%c0_14, %c0_15] : memref<8x128xf32, #tpu.memory_space<vmem>>, vector<1x128xf32>
    %c1 = arith.constant 1 : index
    %c0_16 = arith.constant 0 : index
    %20 = vector.load %arg4[%c1, %c0_16] : memref<8x128xf32, #tpu.memory_space<vmem>>, vector<1x128xf32>
    %cst_17 = arith.constant dense<0.000000e+00> : vector<128xf32>
    %21 = vector.multi_reduction <add>, %18, %cst_17 [0] : vector<32x128xf32> to vector<128xf32>
    %22 = vector.shape_cast %21 : vector<128xf32> to vector<1x128xf32>
    %cst_18 = arith.constant 3.200000e+01 : f32
    %23 = vector.broadcast %cst_18 : f32 to vector<1x128xf32>
    %24 = arith.divf %22, %23 : vector<1x128xf32>
    %25 = vector.broadcast %24 : vector<1x128xf32> to vector<32x128xf32>
    %26 = arith.subf %18, %25 : vector<32x128xf32>
    %27 = arith.mulf %26, %26 : vector<32x128xf32>
    %cst_19 = arith.constant dense<0.000000e+00> : vector<128xf32>
    %28 = vector.multi_reduction <add>, %27, %cst_19 [0] : vector<32x128xf32> to vector<128xf32>
    %29 = vector.shape_cast %28 : vector<128xf32> to vector<1x128xf32>
    %cst_20 = arith.constant 3.200000e+01 : f32
    %30 = vector.broadcast %cst_20 : f32 to vector<1x128xf32>
    %31 = arith.divf %29, %30 : vector<1x128xf32>
    %32 = vector.broadcast %24 : vector<1x128xf32> to vector<32x128xf32>
    %33 = arith.subf %18, %32 : vector<32x128xf32>
    %34 = vector.broadcast %19 : vector<1x128xf32> to vector<32x128xf32>
    %35 = arith.mulf %34, %33 : vector<32x128xf32>
    %cst_21 = arith.constant 1.000000e+00 : f32
    %36 = vector.broadcast %cst_21 : f32 to vector<1x128xf32>
    %37 = arith.addf %31, %36 : vector<1x128xf32>
    %38 = math.rsqrt %37 : vector<1x128xf32>
    %39 = vector.broadcast %38 : vector<1x128xf32> to vector<32x128xf32>
    %40 = arith.mulf %35, %39 : vector<32x128xf32>
    %41 = vector.broadcast %20 : vector<1x128xf32> to vector<32x128xf32>
    %42 = arith.addf %40, %41 : vector<32x128xf32>
    %cst_22 = arith.constant 0.000000e+00 : f32
    %43 = vector.broadcast %cst_22 : f32 to vector<32x128xf32>
    %44 = arith.cmpf ogt, %42, %43 : vector<32x128xf32>
    %cst_23 = arith.constant 0.00999999977 : f32
    %45 = vector.broadcast %cst_23 : f32 to vector<32x128xf32>
    %46 = arith.mulf %45, %42 : vector<32x128xf32>
    %47 = arith.select %44, %42, %46 : vector<32x128xi1>, vector<32x128xf32>
    %48 = arith.truncf %47 : vector<32x128xf32> to vector<32x128xbf16>
    %49 = vector.extract_strided_slice %5 {offsets = [64, 0], sizes = [48, 128], strides = [1, 1]} : vector<112x128xbf16> to vector<48x128xbf16>
    %c512 = arith.constant 512 : index
    %c0_24 = arith.constant 0 : index
    %50 = vector.load %arg2[%c512, %c0_24] : memref<1536x128xbf16, #tpu.memory_space<vmem>>, vector<256x128xbf16>
    %51 = tpu.concatenate %1, %49 in 1 : vector<48x128xbf16>, vector<48x128xbf16> -> vector<48x256xbf16>
    %cst_25 = arith.constant dense<0.000000e+00> : vector<48x128xf32>
    %52 = tpu.matmul %51, %50, %cst_25 {dimension_numbers = #tpu.dot_dimension_numbers<[1], [0], [0], [1], [0, 0, 1, 1], [], []>} : vector<48x256xbf16>, vector<256x128xbf16>, vector<48x128xf32> -> vector<48x128xf32>
    %53 = arith.truncf %52 : vector<48x128xf32> to vector<48x128xbf16>
    %c256_26 = arith.constant 256 : index
    %c0_27 = arith.constant 0 : index
    %54 = vector.load %arg3[%c256_26, %c0_27] : memref<768x128xbf16, #tpu.memory_space<vmem>>, vector<128x128xbf16>
    %cst_28 = arith.constant dense<0.000000e+00> : vector<48x128xf32>
    %55 = tpu.matmul %53, %54, %cst_28 {dimension_numbers = #tpu.dot_dimension_numbers<[1], [0], [0], [1], [0, 0, 1, 1], [], []>} : vector<48x128xbf16>, vector<128x128xbf16>, vector<48x128xf32> -> vector<48x128xf32>
    %c2 = arith.constant 2 : index
    %c0_29 = arith.constant 0 : index
    %56 = vector.load %arg4[%c2, %c0_29] : memref<8x128xf32, #tpu.memory_space<vmem>>, vector<1x128xf32>
    %c3 = arith.constant 3 : index
    %c0_30 = arith.constant 0 : index
    %57 = vector.load %arg4[%c3, %c0_30] : memref<8x128xf32, #tpu.memory_space<vmem>>, vector<1x128xf32>
    %cst_31 = arith.constant dense<0.000000e+00> : vector<128xf32>
    %58 = vector.multi_reduction <add>, %55, %cst_31 [0] : vector<48x128xf32> to vector<128xf32>
    %59 = vector.shape_cast %58 : vector<128xf32> to vector<1x128xf32>
    %cst_32 = arith.constant 4.800000e+01 : f32
    %60 = vector.broadcast %cst_32 : f32 to vector<1x128xf32>
    %61 = arith.divf %59, %60 : vector<1x128xf32>
    %62 = vector.broadcast %61 : vector<1x128xf32> to vector<48x128xf32>
    %63 = arith.subf %55, %62 : vector<48x128xf32>
    %64 = arith.mulf %63, %63 : vector<48x128xf32>
    %cst_33 = arith.constant dense<0.000000e+00> : vector<128xf32>
    %65 = vector.multi_reduction <add>, %64, %cst_33 [0] : vector<48x128xf32> to vector<128xf32>
    %66 = vector.shape_cast %65 : vector<128xf32> to vector<1x128xf32>
    %cst_34 = arith.constant 4.800000e+01 : f32
    %67 = vector.broadcast %cst_34 : f32 to vector<1x128xf32>
    %68 = arith.divf %66, %67 : vector<1x128xf32>
    %69 = vector.broadcast %61 : vector<1x128xf32> to vector<48x128xf32>
    %70 = arith.subf %55, %69 : vector<48x128xf32>
    %71 = vector.broadcast %56 : vector<1x128xf32> to vector<48x128xf32>
    %72 = arith.mulf %71, %70 : vector<48x128xf32>
    %cst_35 = arith.constant 1.000000e+00 : f32
    %73 = vector.broadcast %cst_35 : f32 to vector<1x128xf32>
    %74 = arith.addf %68, %73 : vector<1x128xf32>
    %75 = math.rsqrt %74 : vector<1x128xf32>
    %76 = vector.broadcast %75 : vector<1x128xf32> to vector<48x128xf32>
    %77 = arith.mulf %72, %76 : vector<48x128xf32>
    %78 = vector.broadcast %57 : vector<1x128xf32> to vector<48x128xf32>
    %79 = arith.addf %77, %78 : vector<48x128xf32>
    %cst_36 = arith.constant 0.000000e+00 : f32
    %80 = vector.broadcast %cst_36 : f32 to vector<48x128xf32>
    %81 = arith.cmpf ogt, %79, %80 : vector<48x128xf32>
    %cst_37 = arith.constant 0.00999999977 : f32
    %82 = vector.broadcast %cst_37 : f32 to vector<48x128xf32>
    %83 = arith.mulf %82, %79 : vector<48x128xf32>
    %84 = arith.select %81, %79, %83 : vector<48x128xi1>, vector<48x128xf32>
    %85 = arith.truncf %84 : vector<48x128xf32> to vector<48x128xbf16>
    %86 = tpu.concatenate %48, %85 in 0 : vector<32x128xbf16>, vector<48x128xbf16> -> vector<80x128xbf16>
    %cst_38 = arith.constant dense<0.000000e+00> : vector<112x128xf32>
    %87 = tpu.matmul %2, %86, %cst_38 {dimension_numbers = #tpu.dot_dimension_numbers<[1], [0], [0], [1], [0, 0, 1, 1], [], []>} : vector<112x80xbf16>, vector<80x128xbf16>, vector<112x128xf32> -> vector<112x128xf32>
    %88 = arith.truncf %87 : vector<112x128xf32> to vector<112x128xbf16>
    %89 = vector.extract_strided_slice %88 {offsets = [0, 0], sizes = [32, 128], strides = [1, 1]} : vector<112x128xbf16> to vector<32x128xbf16>
    %c768 = arith.constant 768 : index
    %c0_39 = arith.constant 0 : index
    %90 = vector.load %arg2[%c768, %c0_39] : memref<1536x128xbf16, #tpu.memory_space<vmem>>, vector<256x128xbf16>
    %91 = tpu.concatenate %48, %89 in 1 : vector<32x128xbf16>, vector<32x128xbf16> -> vector<32x256xbf16>
    %cst_40 = arith.constant dense<0.000000e+00> : vector<32x128xf32>
    %92 = tpu.matmul %91, %90, %cst_40 {dimension_numbers = #tpu.dot_dimension_numbers<[1], [0], [0], [1], [0, 0, 1, 1], [], []>} : vector<32x256xbf16>, vector<256x128xbf16>, vector<32x128xf32> -> vector<32x128xf32>
    %93 = arith.truncf %92 : vector<32x128xf32> to vector<32x128xbf16>
    %94 = vector.extract_strided_slice %88 {offsets = [32, 0], sizes = [32, 128], strides = [1, 1]} : vector<112x128xbf16> to vector<32x128xbf16>
    %c1024 = arith.constant 1024 : index
    %c0_41 = arith.constant 0 : index
    %95 = vector.load %arg2[%c1024, %c0_41] : memref<1536x128xbf16, #tpu.memory_space<vmem>>, vector<256x128xbf16>
    %96 = tpu.concatenate %48, %94 in 1 : vector<32x128xbf16>, vector<32x128xbf16> -> vector<32x256xbf16>
    %cst_42 = arith.constant dense<0.000000e+00> : vector<32x128xf32>
    %97 = tpu.matmul %96, %95, %cst_42 {dimension_numbers = #tpu.dot_dimension_numbers<[1], [0], [0], [1], [0, 0, 1, 1], [], []>} : vector<32x256xbf16>, vector<256x128xbf16>, vector<32x128xf32> -> vector<32x128xf32>
    %98 = arith.truncf %97 : vector<32x128xf32> to vector<32x128xbf16>
    %99 = tpu.concatenate %93, %98 in 1 : vector<32x128xbf16>, vector<32x128xbf16> -> vector<32x256xbf16>
    %c384 = arith.constant 384 : index
    %c0_43 = arith.constant 0 : index
    %100 = vector.load %arg3[%c384, %c0_43] : memref<768x128xbf16, #tpu.memory_space<vmem>>, vector<256x128xbf16>
    %cst_44 = arith.constant dense<0.000000e+00> : vector<32x128xf32>
    %101 = tpu.matmul %99, %100, %cst_44 {dimension_numbers = #tpu.dot_dimension_numbers<[1], [0], [0], [1], [0, 0, 1, 1], [], []>} : vector<32x256xbf16>, vector<256x128xbf16>, vector<32x128xf32> -> vector<32x128xf32>
    %c4 = arith.constant 4 : index
    %c0_45 = arith.constant 0 : index
    %102 = vector.load %arg4[%c4, %c0_45] : memref<8x128xf32, #tpu.memory_space<vmem>>, vector<1x128xf32>
    %c5 = arith.constant 5 : index
    %c0_46 = arith.constant 0 : index
    %103 = vector.load %arg4[%c5, %c0_46] : memref<8x128xf32, #tpu.memory_space<vmem>>, vector<1x128xf32>
    %cst_47 = arith.constant dense<0.000000e+00> : vector<128xf32>
    %104 = vector.multi_reduction <add>, %101, %cst_47 [0] : vector<32x128xf32> to vector<128xf32>
    %105 = vector.shape_cast %104 : vector<128xf32> to vector<1x128xf32>
    %cst_48 = arith.constant 3.200000e+01 : f32
    %106 = vector.broadcast %cst_48 : f32 to vector<1x128xf32>
    %107 = arith.divf %105, %106 : vector<1x128xf32>
    %108 = vector.broadcast %107 : vector<1x128xf32> to vector<32x128xf32>
    %109 = arith.subf %101, %108 : vector<32x128xf32>
    %110 = arith.mulf %109, %109 : vector<32x128xf32>
    %cst_49 = arith.constant dense<0.000000e+00> : vector<128xf32>
    %111 = vector.multi_reduction <add>, %110, %cst_49 [0] : vector<32x128xf32> to vector<128xf32>
    %112 = vector.shape_cast %111 : vector<128xf32> to vector<1x128xf32>
    %cst_50 = arith.constant 3.200000e+01 : f32
    %113 = vector.broadcast %cst_50 : f32 to vector<1x128xf32>
    %114 = arith.divf %112, %113 : vector<1x128xf32>
    %115 = vector.broadcast %107 : vector<1x128xf32> to vector<32x128xf32>
    %116 = arith.subf %101, %115 : vector<32x128xf32>
    %117 = vector.broadcast %102 : vector<1x128xf32> to vector<32x128xf32>
    %118 = arith.mulf %117, %116 : vector<32x128xf32>
    %cst_51 = arith.constant 1.000000e+00 : f32
    %119 = vector.broadcast %cst_51 : f32 to vector<1x128xf32>
    %120 = arith.addf %114, %119 : vector<1x128xf32>
    %121 = math.rsqrt %120 : vector<1x128xf32>
    %122 = vector.broadcast %121 : vector<1x128xf32> to vector<32x128xf32>
    %123 = arith.mulf %118, %122 : vector<32x128xf32>
    %124 = vector.broadcast %103 : vector<1x128xf32> to vector<32x128xf32>
    %125 = arith.addf %123, %124 : vector<32x128xf32>
    %cst_52 = arith.constant 0.000000e+00 : f32
    %126 = vector.broadcast %cst_52 : f32 to vector<32x128xf32>
    %127 = arith.cmpf ogt, %125, %126 : vector<32x128xf32>
    %cst_53 = arith.constant 0.00999999977 : f32
    %128 = vector.broadcast %cst_53 : f32 to vector<32x128xf32>
    %129 = arith.mulf %128, %125 : vector<32x128xf32>
    %130 = arith.select %127, %125, %129 : vector<32x128xi1>, vector<32x128xf32>
    %131 = arith.truncf %130 : vector<32x128xf32> to vector<32x128xbf16>
    %c0_54 = arith.constant 0 : index
    %c0_55 = arith.constant 0 : index
    %132 = vector.load %arg5[%c0_54, %c0_55] : memref<96x32xbf16, #tpu.memory_space<vmem>>, vector<48x32xbf16>
    %cst_56 = arith.constant dense<0.000000e+00> : vector<48x128xf32>
    %133 = tpu.matmul %132, %131, %cst_56 {dimension_numbers = #tpu.dot_dimension_numbers<[1], [0], [0], [1], [0, 0, 1, 1], [], []>} : vector<48x32xbf16>, vector<32x128xbf16>, vector<48x128xf32> -> vector<48x128xf32>
    %c48 = arith.constant 48 : index
    %c0_57 = arith.constant 0 : index
    %134 = vector.load %arg5[%c48, %c0_57] : memref<96x32xbf16, #tpu.memory_space<vmem>>, vector<48x32xbf16>
    %cst_58 = arith.constant dense<0.000000e+00> : vector<48x128xf32>
    %135 = tpu.matmul %134, %131, %cst_58 {dimension_numbers = #tpu.dot_dimension_numbers<[1], [0], [0], [1], [0, 0, 1, 1], [], []>} : vector<48x32xbf16>, vector<32x128xbf16>, vector<48x128xf32> -> vector<48x128xf32>
    %136 = arith.mulf %133, %135 : vector<48x128xf32>
    %cst_59 = arith.constant dense<0.000000e+00> : vector<48xf32>
    %137 = vector.multi_reduction <add>, %136, %cst_59 [1] : vector<48x128xf32> to vector<48xf32>
    %138 = vector.shape_cast %137 : vector<48xf32> to vector<48x1xf32>
    %139 = vector.shape_cast %138 : vector<48x1xf32> to vector<48x1xf32>
    %140 = vector.broadcast %139 : vector<48x1xf32> to vector<48x128xf32>
    %c0_60 = arith.constant 0 : index
    %c0_61 = arith.constant 0 : index
    %141 = vector.load %arg6[%c0_60, %c0_61] : memref<48x128xf32, #tpu.memory_space<vmem>>, vector<48x128xf32>
    tpu.vector_store %arg6[%c0_60, %c0_61], %140 {strides = array<i32>} : memref<48x128xf32, #tpu.memory_space<vmem>>, vector<48x128xf32>,
    return
  }
}

</mosaic_0001>

<llo_original>
// kernel: forward.1
$region0: #{forward.1}
  #allocation0 [shape = 'u32[]', space=smem, size = 0x4, offset = 0x4, fixed_abs, tag = 'smem constant byte address 0x4 - core index']
  #allocation1 [shape = 'u32[144,128]{1,0:T(1,128)}', space=vmem, size = 0x12000, scoped, tag = 'internal scratch']
  %s0 = inlined_call_operand.vmem [shape: bf16[80,128], index: 0, kind: input, shape index: {}]
  %s1 = inlined_call_operand.vmem [shape: bf16[112,80], index: 1, kind: input, shape index: {}]
  %s2 = inlined_call_operand.hbm [shape: bf16[1536,128], index: 2, kind: input, shape index: {}]
  %s3 = inlined_call_operand.hbm [shape: bf16[768,128], index: 3, kind: input, shape index: {}]
  %s4 = inlined_call_operand.vmem [shape: f32[8,128], index: 4, kind: input, shape index: {}]
  %s5 = inlined_call_operand.vmem [shape: bf16[96,32], index: 5, kind: input, shape index: {}]
  %s6 = inlined_call_operand.vmem [shape: f32[48,128], index: 6, kind: output, shape index: {}]
  %s7 = sld [smem:[#allocation0]]
  $region42: #{forward.1} parent=0
    _
  %s9 = ssub.s32 1, %s7
  %s10 = scalar_select 0, %s9, %s7
  $region1: #{forward.1} parent=0
    #allocation2 [shape = 'u8[393216]{0}', space=vmem, size = 0x60000, scoped, tag = 'input window, operand 2, single buffered']
    #allocation3 [shape = 's32[1]{0}', space=sflag, size = 0x4, scoped, tag = 'scoped memory for forward.1']
    #allocation4 [shape = 'u8[196608]{0}', space=vmem, size = 0x30000, scoped, tag = 'input window, operand 3, single buffered']
    #allocation5 [shape = 's32[1]{0}', space=sflag, size = 0x4, scoped, tag = 'scoped memory for forward.1']
    %11 = vsyncpa [#allocation3], 0
    %12 = vsyncpa [#allocation5], 0
    // Predicated region
    $region2: #{forward.1} parent=1 // pred_check
      _
    $region3: #{forward.1} parent=1 // pred_check_branch
      %14 = sbr.rel (0) target = $region5
    $region4: #{forward.1} parent=1 // pred_region
      _
    $region5: #{forward.1} parent=1 // pred_fallthru
      _
    // Predicated region
    $region6: #{forward.1} parent=1 // pred_check
      _
    $region7: #{forward.1} parent=1 // pred_check_branch
      %16 = sbr.rel (0) target = $region9
    $region8: #{forward.1} parent=1 // pred_region
      _
    $region9: #{forward.1} parent=1 // pred_fallthru
      _
    // Predicated region
    $region10: #{forward.1} parent=1 // pred_check
      _
    $region11: #{forward.1} parent=1 // pred_check_branch
      %18 = sbr.rel (0) target = $region13
    $region12: #{forward.1} parent=1 // pred_region
      %s20 = ssub.s32 12288, 12288
      %21 = vsyncadd [#allocation3], %s20
      %s22 = sshll.u32 [#allocation2], 4
      %s23 = int_to_ptr.vmem [resolvable:$true] %s22
      %28 = dma.hbm_to_vmem [thread:$0]  %s2, 12288, %s23, [#allocation3], 64, 64, 4
    $region13: #{forward.1} parent=1 // pred_fallthru
      _
    // Predicated region
    $region14: #{forward.1} parent=1 // pred_check
      _
    $region15: #{forward.1} parent=1 // pred_check_branch
      %30 = sbr.rel (0) target = $region17
    $region16: #{forward.1} parent=1 // pred_region
      %s32 = ssub.s32 6144, 6144
      %33 = vsyncadd [#allocation5], %s32
      %s34 = sshll.u32 [#allocation4], 4
      %s35 = int_to_ptr.vmem [resolvable:$true] %s34
      %40 = dma.hbm_to_vmem [thread:$0]  %s3, 6144, %s35, [#allocation5], 64, 64, 4
    $region17: #{forward.1} parent=1 // pred_fallthru
      _
    // Predicated region
    $region18: #{forward.1} parent=1 // pred_check
      _
    $region19: #{forward.1} parent=1 // pred_check_branch
      %42 = sbr.rel (0) target = $region21
    $region20: #{forward.1} parent=1 // pred_region
      _
    $region21: #{forward.1} parent=1 // pred_fallthru
      _
    // Predicated region
    $region22: #{forward.1} parent=1 // pred_check
      _
    $region23: #{forward.1} parent=1 // pred_check_branch
      %44 = sbr.rel (0) target = $region25
    $region24: #{forward.1} parent=1 // pred_region
      _
    $region25: #{forward.1} parent=1 // pred_fallthru
      _
    // Predicated region
    $region26: #{forward.1} parent=1 // pred_check
      _
    $region27: #{forward.1} parent=1 // pred_check_branch
      %46 = sbr.rel (0) target = $region29
    $region28: #{forward.1} parent=1 // pred_region
      %47 = dma.done [#allocation3], 12288
    $region29: #{forward.1} parent=1 // pred_fallthru
      _
    // Predicated region
    $region30: #{forward.1} parent=1 // pred_check
      _
    $region31: #{forward.1} parent=1 // pred_check_branch
      %49 = sbr.rel (0) target = $region33
    $region32: #{forward.1} parent=1 // pred_region
      %50 = dma.done [#allocation5], 6144
    $region33: #{forward.1} parent=1 // pred_fallthru
      _
    %v52 = vld [vmem:[%s0] sm:$0xf]
    %v53 = vld [vmem:[%s0 + $0x4] sm:$0xf]
    %v54 = vld [vmem:[%s0 + $0x8] sm:$0xf]
    %v55 = vld [vmem:[%s0 + $0xc] sm:$0xf]
    %v56 = vld [vmem:[%s0 + $0x10] sm:$0xf]
    %v57 = vld [vmem:[%s0 + $0x14] sm:$0xf]
    %v58 = vld [vmem:[%s0 + $0x18] sm:$0xf]
    %v59 = vld [vmem:[%s0 + $0x1c] sm:$0xf]
    %v60 = vld [vmem:[%s0 + $0x20] sm:$0xf]
    %v61 = vld [vmem:[%s0 + $0x24] sm:$0xf]
    %v62 = vld [vmem:[%s1] sm:$0xf]
    %v63 = vld [vmem:[%s1 + $0x4] sm:$0xf]
    %v64 = vld [vmem:[%s1 + $0x8] sm:$0xf]
    %v65 = vld [vmem:[%s1 + $0xc] sm:$0xf]
    %v66 = vld [vmem:[%s1 + $0x10] sm:$0xf]
    %v67 = vld [vmem:[%s1 + $0x14] sm:$0xf]
    %v68 = vld [vmem:[%s1 + $0x18] sm:$0xf]
    %v69 = vld [vmem:[%s1 + $0x1c] sm:$0xf]
    %v70 = vld [vmem:[%s1 + $0x20] sm:$0xf]
    %v71 = vld [vmem:[%s1 + $0x24] sm:$0xf]
    %v72 = vld [vmem:[%s1 + $0x28] sm:$0xf]
    %v73 = vld [vmem:[%s1 + $0x2c] sm:$0xf]
    %v74 = vld [vmem:[%s1 + $0x30] sm:$0xf]
    %v75 = vld [vmem:[%s1 + $0x34] sm:$0xf]
    %v76 = vld [vmem:[%s0] sm:$0xf]
    %v77 = vld [vmem:[%s0 + $0x4] sm:$0xf]
    %v78 = vld [vmem:[%s0 + $0x8] sm:$0xf]
    %v79 = vld [vmem:[%s0 + $0xc] sm:$0xf]
    %v94 = vunpack.c.l.b16 %v62
    %v95 = vunpack.c.l.b16 %v63
    %v96 = vunpack.c.l.b16 %v64
    %v97 = vunpack.c.l.b16 %v65
    %v98 = vunpack.c.l.b16 %v66
    %v99 = vunpack.c.l.b16 %v67
    %v100 = vunpack.c.l.b16 %v68
    %v101 = vunpack.c.l.b16 %v69
    %v102 = vunpack.c.l.b16 %v70
    %v103 = vunpack.c.l.b16 %v71
    %v104 = vunpack.c.l.b16 %v72
    %v105 = vunpack.c.l.b16 %v73
    %v106 = vunpack.c.l.b16 %v74
    %v107 = vunpack.c.l.b16 %v75
    %v108 = vpack.c.b16 %v95, %v94
    %v109 = vpack.c.b16 %v97, %v96
    %v110 = vpack.c.b16 %v99, %v98
    %v111 = vpack.c.b16 %v101, %v100
    %v112 = vpack.c.b16 %v103, %v102
    %v113 = vpack.c.b16 %v105, %v104
    %v114 = vpack.c.b16 %v107, %v106
    %v125 = vunpack.c.l.b16 %v76
    %v126 = vunpack.c.l.b16 %v77
    %v127 = vunpack.c.l.b16 %v78
    %v128 = vunpack.c.l.b16 %v79
    %v129 = vunpack.c.l.b16 %v56
    %v130 = vunpack.c.l.b16 %v57
    %v131 = vunpack.c.l.b16 %v58
    %v132 = vunpack.c.l.b16 %v59
    %v133 = vunpack.c.l.b16 %v60
    %v134 = vunpack.c.l.b16 %v61
    %v135 = vpack.c.b16 %v126, %v125
    %v136 = vpack.c.b16 %v128, %v127
    %v137 = vpack.c.b16 %v130, %v129
    %v138 = vpack.c.b16 %v132, %v131
    %v139 = vpack.c.b16 %v134, %v133
    %vm145 = vcmask 654336
    %v147 = vsel %vm145, %v108, 0
    %v150 = vsel %vm145, %v109, 0
    %v153 = vsel %vm145, %v110, 0
    %v156 = vsel %vm145, %v111, 0
    %v159 = vsel %vm145, %v112, 0
    %v162 = vsel %vm145, %v113, 0
    %v165 = vsel %vm145, %v114, 0
    %167 = vmatprep.subr.bf16.mxu0 0
    %168 = vmatpush1.bf16.msra.mxu0 %v135
    %169 = vmatprep.subr.bf16.mxu0 0
    %170 = vmatpush1.bf16.msra.mxu0 %v136
    %171 = vmatprep.subr.bf16.mxu0 0
    %172 = vmatpush1.bf16.msra.mxu0 %v137
    %173 = vmatprep.subr.bf16.mxu0 0
    %174 = vmatpush1.bf16.msra.mxu0 %v138
    %175 = vmatprep.subr.bf16.mxu0 0
    %176 = vmatpush1.bf16.msra.mxu0 %v139
    %177 = vmatprep.subr.bf16.mxu0 0
    %178 = vmatpush1.bf16.msra.mxu0 0
    %179 = vmatprep.subr.bf16.mxu0 0
    %180 = vmatpush1.bf16.msra.mxu0 0
    %181 = vmatprep.subr.bf16.mxu0 0
    %182 = vmatpush1.bf16.msra.mxu0 0
    %183 = vmatprep.subr.bf16.mxu0 0
    %184 = vmatpush1.bf16.msra.mxu0 0
    %185 = vmatprep.subr.bf16.mxu0 0
    %186 = vmatpush1.bf16.msra.mxu0 0
    %187 = vmatprep.subr.bf16.mxu0 0
    %188 = vmatpush1.bf16.msra.mxu0 0
    %189 = vmatprep.subr.bf16.mxu0 0
    %190 = vmatpush1.bf16.msra.mxu0 0
    %191 = vmatprep.subr.bf16.mxu0 0
    %192 = vmatpush1.bf16.msra.mxu0 0
    %193 = vmatprep.subr.bf16.mxu0 0
    %194 = vmatpush1.bf16.msra.mxu0 0
    %195 = vmatprep.subr.bf16.mxu0 0
    %196 = vmatpush1.bf16.msra.mxu0 0
    %197 = vmatprep.subr.bf16.mxu0 0
    %198 = vmatpush1.bf16.msra.mxu0 0
    %199 = vmatprep.mubr.bf16.mxu0 0
    %200 = vmatmul.mubr.bf16.gmra.mrb[0].mxu0 %v147
    %v201 = vpop.f32.mrb[0].mxu0
    %v202 = vadd.f32 0.0, %v201
    %v203 = vpop.f32.mrb[0].mxu0
    %v204 = vpop.f32.mrb[0].mxu0
    %v205 = vadd.f32 0.0, %v204
    %v206 = vpop.f32.mrb[0].mxu0
    %207 = vmatprep.mubr.bf16.mxu0 0
    %208 = vmatmul.mubr.bf16.gmra.mrb[0].mxu0 %v150
    %v209 = vpop.f32.mrb[0].mxu0
    %v210 = vadd.f32 0.0, %v209
    %v211 = vpop.f32.mrb[0].mxu0
    %v212 = vpop.f32.mrb[0].mxu0
    %v213 = vadd.f32 0.0, %v212
    %v214 = vpop.f32.mrb[0].mxu0
    %215 = vmatprep.mubr.bf16.mxu0 0
    %216 = vmatmul.mubr.bf16.gmra.mrb[0].mxu0 %v153
    %v217 = vpop.f32.mrb[0].mxu0
    %v218 = vadd.f32 0.0, %v217
    %v219 = vpop.f32.mrb[0].mxu0
    %v220 = vpop.f32.mrb[0].mxu0
    %v221 = vadd.f32 0.0, %v220
    %v222 = vpop.f32.mrb[0].mxu0
    %223 = vmatprep.mubr.bf16.mxu0 0
    %224 = vmatmul.mubr.bf16.gmra.mrb[0].mxu0 %v156
    %v225 = vpop.f32.mrb[0].mxu0
    %v226 = vadd.f32 0.0, %v225
    %v227 = vpop.f32.mrb[0].mxu0
    %v228 = vpop.f32.mrb[0].mxu0
    %v229 = vadd.f32 0.0, %v228
    %v230 = vpop.f32.mrb[0].mxu0
    %231 = vmatprep.mubr.bf16.mxu0 0
    %232 = vmatmul.mubr.bf16.gmra.mrb[0].mxu0 %v159
    %v233 = vpop.f32.mrb[0].mxu0
    %v234 = vadd.f32 0.0, %v233
    %v235 = vpop.f32.mrb[0].mxu0
    %v236 = vpop.f32.mrb[0].mxu0
    %v237 = vadd.f32 0.0, %v236
    %v238 = vpop.f32.mrb[0].mxu0
    %239 = vmatprep.mubr.bf16.mxu0 0
    %240 = vmatmul.mubr.bf16.gmra.mrb[0].mxu0 %v162
    %v241 = vpop.f32.mrb[0].mxu0
    %v242 = vadd.f32 0.0, %v241
    %v243 = vpop.f32.mrb[0].mxu0
    %v244 = vpop.f32.mrb[0].mxu0
    %v245 = vadd.f32 0.0, %v244
    %v246 = vpop.f32.mrb[0].mxu0
    %247 = vmatprep.mubr.bf16.mxu0 0
    %248 = vmatmul.mubr.bf16.gmra.mrb[0].mxu0 %v165
    %v249 = vpop.f32.mrb[0].mxu0
    %v250 = vadd.f32 0.0, %v249
    %v251 = vpop.f32.mrb[0].mxu0
    %v252 = vpop.f32.mrb[0].mxu0
    %v253 = vadd.f32 0.0, %v252
    %v254 = vpop.f32.mrb[0].mxu0
    %255 = vdwg.mxu0
    %v256 = vpack.c.bf16 %v205, %v202
    %v257 = vpack.c.bf16 %v213, %v210
    %v258 = vpack.c.bf16 %v221, %v218
    %v259 = vpack.c.bf16 %v229, %v226
    %v260 = vpack.c.bf16 %v237, %v234
    %v261 = vpack.c.bf16 %v245, %v242
    %v262 = vpack.c.bf16 %v253, %v250
    %v263 = vld [vmem:[#allocation2] sm:$0xf]
    %v264 = vld [vmem:[#allocation2 + $0x4] sm:$0xf]
    %v265 = vld [vmem:[#allocation2 + $0x8] sm:$0xf]
    %v266 = vld [vmem:[#allocation2 + $0xc] sm:$0xf]
    %v267 = vld [vmem:[#allocation2 + $0x10] sm:$0xf]
    %v268 = vld [vmem:[#allocation2 + $0x14] sm:$0xf]
    %v269 = vld [vmem:[#allocation2 + $0x18] sm:$0xf]
    %v270 = vld [vmem:[#allocation2 + $0x1c] sm:$0xf]
    %v271 = vld [vmem:[#allocation2 + $0x20] sm:$0xf]
    %v272 = vld [vmem:[#allocation2 + $0x24] sm:$0xf]
    %v273 = vld [vmem:[#allocation2 + $0x28] sm:$0xf]
    %v274 = vld [vmem:[#allocation2 + $0x2c] sm:$0xf]
    %v275 = vld [vmem:[#allocation2 + $0x30] sm:$0xf]
    %v276 = vld [vmem:[#allocation2 + $0x34] sm:$0xf]
    %v277 = vld [vmem:[#allocation2 + $0x38] sm:$0xf]
    %v278 = vld [vmem:[#allocation2 + $0x3c] sm:$0xf]
    %v279 = vld [vmem:[#allocation2 + $0x40] sm:$0xf]
    %v280 = vld [vmem:[#allocation2 + $0x44] sm:$0xf]
    %v281 = vld [vmem:[#allocation2 + $0x48] sm:$0xf]
    %v282 = vld [vmem:[#allocation2 + $0x4c] sm:$0xf]
    %v283 = vld [vmem:[#allocation2 + $0x50] sm:$0xf]
    %v284 = vld [vmem:[#allocation2 + $0x54] sm:$0xf]
    %v285 = vld [vmem:[#allocation2 + $0x58] sm:$0xf]
    %v286 = vld [vmem:[#allocation2 + $0x5c] sm:$0xf]
    %v287 = vld [vmem:[#allocation2 + $0x60] sm:$0xf]
    %v288 = vld [vmem:[#allocation2 + $0x64] sm:$0xf]
    %v289 = vld [vmem:[#allocation2 + $0x68] sm:$0xf]
    %v290 = vld [vmem:[#allocation2 + $0x6c] sm:$0xf]
    %v291 = vld [vmem:[#allocation2 + $0x70] sm:$0xf]
    %v292 = vld [vmem:[#allocation2 + $0x74] sm:$0xf]
    %v293 = vld [vmem:[#allocation2 + $0x78] sm:$0xf]
    %v294 = vld [vmem:[#allocation2 + $0x7c] sm:$0xf]
    %v299 = vunpack.c.l.b16 %v52
    %v300 = vunpack.c.l.b16 %v53
    %v301 = vunpack.c.l.b16 %v54
    %v302 = vunpack.c.l.b16 %v55
    %v303 = vpack.c.b16 %v300, %v299
    %v304 = vpack.c.b16 %v302, %v301
    %v339 = vunpack.c.l.b16 %v263
    %v340 = vunpack.c.l.b16 %v264
    %v341 = vunpack.c.l.b16 %v265
    %v342 = vunpack.c.l.b16 %v266
    %v343 = vunpack.c.l.b16 %v267
    %v344 = vunpack.c.l.b16 %v268
    %v345 = vunpack.c.l.b16 %v269
    %v346 = vunpack.c.l.b16 %v270
    %v347 = vunpack.c.l.b16 %v271
    %v348 = vunpack.c.l.b16 %v272
    %v349 = vunpack.c.l.b16 %v273
    %v350 = vunpack.c.l.b16 %v274
    %v351 = vunpack.c.l.b16 %v275
    %v352 = vunpack.c.l.b16 %v276
    %v353 = vunpack.c.l.b16 %v277
    %v354 = vunpack.c.l.b16 %v278
    %v355 = vunpack.c.l.b16 %v279
    %v356 = vunpack.c.l.b16 %v280
    %v357 = vunpack.c.l.b16 %v281
    %v358 = vunpack.c.l.b16 %v282
    %v359 = vunpack.c.l.b16 %v283
    %v360 = vunpack.c.l.b16 %v284
    %v361 = vunpack.c.l.b16 %v285
    %v362 = vunpack.c.l.b16 %v286
    %v363 = vunpack.c.l.b16 %v287
    %v364 = vunpack.c.l.b16 %v288
    %v365 = vunpack.c.l.b16 %v289
    %v366 = vunpack.c.l.b16 %v290
    %v367 = vunpack.c.l.b16 %v291
    %v368 = vunpack.c.l.b16 %v292
    %v369 = vunpack.c.l.b16 %v293
    %v370 = vunpack.c.l.b16 %v294
    %v371 = vpack.c.b16 %v340, %v339
    %v372 = vpack.c.b16 %v342, %v341
    %v373 = vpack.c.b16 %v344, %v343
    %v374 = vpack.c.b16 %v346, %v345
    %v375 = vpack.c.b16 %v348, %v347
    %v376 = vpack.c.b16 %v350, %v349
    %v377 = vpack.c.b16 %v352, %v351
    %v378 = vpack.c.b16 %v354, %v353
    %v379 = vpack.c.b16 %v356, %v355
    %v380 = vpack.c.b16 %v358, %v357
    %v381 = vpack.c.b16 %v360, %v359
    %v382 = vpack.c.b16 %v362, %v361
    %v383 = vpack.c.b16 %v364, %v363
    %v384 = vpack.c.b16 %v366, %v365
    %v385 = vpack.c.b16 %v368, %v367
    %v386 = vpack.c.b16 %v370, %v369
    %403 = vmatprep.subr.bf16.mxu0 0
    %404 = vmatpush1.bf16.msra.mxu0 %v371
    %405 = vmatprep.subr.bf16.mxu0 0
    %406 = vmatpush1.bf16.msra.mxu0 %v372
    %407 = vmatprep.subr.bf16.mxu0 0
    %408 = vmatpush1.bf16.msra.mxu0 %v373
    %409 = vmatprep.subr.bf16.mxu0 0
    %410 = vmatpush1.bf16.msra.mxu0 %v374
    %411 = vmatprep.subr.bf16.mxu0 0
    %412 = vmatpush1.bf16.msra.mxu0 %v375
    %413 = vmatprep.subr.bf16.mxu0 0
    %414 = vmatpush1.bf16.msra.mxu0 %v376
    %415 = vmatprep.subr.bf16.mxu0 0
    %416 = vmatpush1.bf16.msra.mxu0 %v377
    %417 = vmatprep.subr.bf16.mxu0 0
    %418 = vmatpush1.bf16.msra.mxu0 %v378
    %419 = vmatprep.subr.bf16.mxu0 0
    %420 = vmatpush1.bf16.msra.mxu0 %v379
    %421 = vmatprep.subr.bf16.mxu0 0
    %422 = vmatpush1.bf16.msra.mxu0 %v380
    %423 = vmatprep.subr.bf16.mxu0 0
    %424 = vmatpush1.bf16.msra.mxu0 %v381
    %425 = vmatprep.subr.bf16.mxu0 0
    %426 = vmatpush1.bf16.msra.mxu0 %v382
    %427 = vmatprep.subr.bf16.mxu0 0
    %428 = vmatpush1.bf16.msra.mxu0 %v383
    %429 = vmatprep.subr.bf16.mxu0 0
    %430 = vmatpush1.bf16.msra.mxu0 %v384
    %431 = vmatprep.subr.bf16.mxu0 0
    %432 = vmatpush1.bf16.msra.mxu0 %v385
    %433 = vmatprep.subr.bf16.mxu0 0
    %434 = vmatpush1.bf16.msra.mxu0 %v386
    %435 = vmatprep.mubr.bf16.mxu0 %v256
    %436 = vmatmul.mubr.bf16.gmra.mrb[0].mxu0 %v303
    %v437 = vpop.f32.mrb[0].mxu0
    %v438 = vadd.f32 0.0, %v437
    %v439 = vpop.f32.mrb[0].mxu0
    %v440 = vpop.f32.mrb[0].mxu0
    %v441 = vadd.f32 0.0, %v440
    %v442 = vpop.f32.mrb[0].mxu0
    %443 = vmatprep.mubr.bf16.mxu0 %v257
    %444 = vmatmul.mubr.bf16.gmra.mrb[0].mxu0 %v304
    %v445 = vpop.f32.mrb[0].mxu0
    %v446 = vadd.f32 0.0, %v445
    %v447 = vpop.f32.mrb[0].mxu0
    %v448 = vpop.f32.mrb[0].mxu0
    %v449 = vadd.f32 0.0, %v448
    %v450 = vpop.f32.mrb[0].mxu0
    %451 = vdwg.mxu0
    %v452 = vpack.c.bf16 %v441, %v438
    %v453 = vpack.c.bf16 %v449, %v446
    %v454 = vld [vmem:[#allocation2 + $0x80] sm:$0xf]
    %v455 = vld [vmem:[#allocation2 + $0x84] sm:$0xf]
    %v456 = vld [vmem:[#allocation2 + $0x88] sm:$0xf]
    %v457 = vld [vmem:[#allocation2 + $0x8c] sm:$0xf]
    %v458 = vld [vmem:[#allocation2 + $0x90] sm:$0xf]
    %v459 = vld [vmem:[#allocation2 + $0x94] sm:$0xf]
    %v460 = vld [vmem:[#allocation2 + $0x98] sm:$0xf]
    %v461 = vld [vmem:[#allocation2 + $0x9c] sm:$0xf]
    %v462 = vld [vmem:[#allocation2 + $0xa0] sm:$0xf]
    %v463 = vld [vmem:[#allocation2 + $0xa4] sm:$0xf]
    %v464 = vld [vmem:[#allocation2 + $0xa8] sm:$0xf]
    %v465 = vld [vmem:[#allocation2 + $0xac] sm:$0xf]
    %v466 = vld [vmem:[#allocation2 + $0xb0] sm:$0xf]
    %v467 = vld [vmem:[#allocation2 + $0xb4] sm:$0xf]
    %v468 = vld [vmem:[#allocation2 + $0xb8] sm:$0xf]
    %v469 = vld [vmem:[#allocation2 + $0xbc] sm:$0xf]
    %v470 = vld [vmem:[#allocation2 + $0xc0] sm:$0xf]
    %v471 = vld [vmem:[#allocation2 + $0xc4] sm:$0xf]
    %v472 = vld [vmem:[#allocation2 + $0xc8] sm:$0xf]
    %v473 = vld [vmem:[#allocation2 + $0xcc] sm:$0xf]
    %v474 = vld [vmem:[#allocation2 + $0xd0] sm:$0xf]
    %v475 = vld [vmem:[#allocation2 + $0xd4] sm:$0xf]
    %v476 = vld [vmem:[#allocation2 + $0xd8] sm:$0xf]
    %v477 = vld [vmem:[#allocation2 + $0xdc] sm:$0xf]
    %v478 = vld [vmem:[#allocation2 + $0xe0] sm:$0xf]
    %v479 = vld [vmem:[#allocation2 + $0xe4] sm:$0xf]
    %v480 = vld [vmem:[#allocation2 + $0xe8] sm:$0xf]
    %v481 = vld [vmem:[#allocation2 + $0xec] sm:$0xf]
    %v482 = vld [vmem:[#allocation2 + $0xf0] sm:$0xf]
    %v483 = vld [vmem:[#allocation2 + $0xf4] sm:$0xf]
    %v484 = vld [vmem:[#allocation2 + $0xf8] sm:$0xf]
    %v485 = vld [vmem:[#allocation2 + $0xfc] sm:$0xf]
    %v518 = vunpack.c.l.b16 %v454
    %v519 = vunpack.c.l.b16 %v455
    %v520 = vunpack.c.l.b16 %v456
    %v521 = vunpack.c.l.b16 %v457
    %v522 = vunpack.c.l.b16 %v458
    %v523 = vunpack.c.l.b16 %v459
    %v524 = vunpack.c.l.b16 %v460
    %v525 = vunpack.c.l.b16 %v461
    %v526 = vunpack.c.l.b16 %v462
    %v527 = vunpack.c.l.b16 %v463
    %v528 = vunpack.c.l.b16 %v464
    %v529 = vunpack.c.l.b16 %v465
    %v530 = vunpack.c.l.b16 %v466
    %v531 = vunpack.c.l.b16 %v467
    %v532 = vunpack.c.l.b16 %v468
    %v533 = vunpack.c.l.b16 %v469
    %v534 = vunpack.c.l.b16 %v470
    %v535 = vunpack.c.l.b16 %v471
    %v536 = vunpack.c.l.b16 %v472
    %v537 = vunpack.c.l.b16 %v473
    %v538 = vunpack.c.l.b16 %v474
    %v539 = vunpack.c.l.b16 %v475
    %v540 = vunpack.c.l.b16 %v476
    %v541 = vunpack.c.l.b16 %v477
    %v542 = vunpack.c.l.b16 %v478
    %v543 = vunpack.c.l.b16 %v479
    %v544 = vunpack.c.l.b16 %v480
    %v545 = vunpack.c.l.b16 %v481
    %v546 = vunpack.c.l.b16 %v482
    %v547 = vunpack.c.l.b16 %v483
    %v548 = vunpack.c.l.b16 %v484
    %v549 = vunpack.c.l.b16 %v485
    %v550 = vpack.c.b16 %v519, %v518
    %v551 = vpack.c.b16 %v521, %v520
    %v552 = vpack.c.b16 %v523, %v522
    %v553 = vpack.c.b16 %v525, %v524
    %v554 = vpack.c.b16 %v527, %v526
    %v555 = vpack.c.b16 %v529, %v528
    %v556 = vpack.c.b16 %v531, %v530
    %v557 = vpack.c.b16 %v533, %v532
    %v558 = vpack.c.b16 %v535, %v534
    %v559 = vpack.c.b16 %v537, %v536
    %v560 = vpack.c.b16 %v539, %v538
    %v561 = vpack.c.b16 %v541, %v540
    %v562 = vpack.c.b16 %v543, %v542
    %v563 = vpack.c.b16 %v545, %v544
    %v564 = vpack.c.b16 %v547, %v546
    %v565 = vpack.c.b16 %v549, %v548
    %582 = vmatprep.subr.bf16.mxu0 0
    %583 = vmatpush1.bf16.msra.mxu0 %v550
    %584 = vmatprep.subr.bf16.mxu0 0
    %585 = vmatpush1.bf16.msra.mxu0 %v551
    %586 = vmatprep.subr.bf16.mxu0 0
    %587 = vmatpush1.bf16.msra.mxu0 %v552
    %588 = vmatprep.subr.bf16.mxu0 0
    %589 = vmatpush1.bf16.msra.mxu0 %v553
    %590 = vmatprep.subr.bf16.mxu0 0
    %591 = vmatpush1.bf16.msra.mxu0 %v554
    %592 = vmatprep.subr.bf16.mxu0 0
    %593 = vmatpush1.bf16.msra.mxu0 %v555
    %594 = vmatprep.subr.bf16.mxu0 0
    %595 = vmatpush1.bf16.msra.mxu0 %v556
    %596 = vmatprep.subr.bf16.mxu0 0
    %597 = vmatpush1.bf16.msra.mxu0 %v557
    %598 = vmatprep.subr.bf16.mxu0 0
    %599 = vmatpush1.bf16.msra.mxu0 %v558
    %600 = vmatprep.subr.bf16.mxu0 0
    %601 = vmatpush1.bf16.msra.mxu0 %v559
    %602 = vmatprep.subr.bf16.mxu0 0
    %603 = vmatpush1.bf16.msra.mxu0 %v560
    %604 = vmatprep.subr.bf16.mxu0 0
    %605 = vmatpush1.bf16.msra.mxu0 %v561
    %606 = vmatprep.subr.bf16.mxu0 0
    %607 = vmatpush1.bf16.msra.mxu0 %v562
    %608 = vmatprep.subr.bf16.mxu0 0
    %609 = vmatpush1.bf16.msra.mxu0 %v563
    %610 = vmatprep.subr.bf16.mxu0 0
    %611 = vmatpush1.bf16.msra.mxu0 %v564
    %612 = vmatprep.subr.bf16.mxu0 0
    %613 = vmatpush1.bf16.msra.mxu0 %v565
    %614 = vmatprep.mubr.bf16.mxu0 %v258
    %615 = vmatmul.mubr.bf16.gmra.mrb[0].mxu0 %v303
    %v616 = vpop.f32.mrb[0].mxu0
    %v617 = vadd.f32 0.0, %v616
    %v618 = vpop.f32.mrb[0].mxu0
    %v619 = vpop.f32.mrb[0].mxu0
    %v620 = vadd.f32 0.0, %v619
    %v621 = vpop.f32.mrb[0].mxu0
    %622 = vmatprep.mubr.bf16.mxu0 %v259
    %623 = vmatmul.mubr.bf16.gmra.mrb[0].mxu0 %v304
    %v624 = vpop.f32.mrb[0].mxu0
    %v625 = vadd.f32 0.0, %v624
    %v626 = vpop.f32.mrb[0].mxu0
    %v627 = vpop.f32.mrb[0].mxu0
    %v628 = vadd.f32 0.0, %v627
    %v629 = vpop.f32.mrb[0].mxu0
    %630 = vdwg.mxu0
    %v631 = vpack.c.bf16 %v620, %v617
    %v632 = vpack.c.bf16 %v628, %v625
    %v633 = vld [vmem:[#allocation4] sm:$0xf]
    %v634 = vld [vmem:[#allocation4 + $0x4] sm:$0xf]
    %v635 = vld [vmem:[#allocation4 + $0x8] sm:$0xf]
    %v636 = vld [vmem:[#allocation4 + $0xc] sm:$0xf]
    %v637 = vld [vmem:[#allocation4 + $0x10] sm:$0xf]
    %v638 = vld [vmem:[#allocation4 + $0x14] sm:$0xf]
    %v639 = vld [vmem:[#allocation4 + $0x18] sm:$0xf]
    %v640 = vld [vmem:[#allocation4 + $0x1c] sm:$0xf]
    %v641 = vld [vmem:[#allocation4 + $0x20] sm:$0xf]
    %v642 = vld [vmem:[#allocation4 + $0x24] sm:$0xf]
    %v643 = vld [vmem:[#allocation4 + $0x28] sm:$0xf]
    %v644 = vld [vmem:[#allocation4 + $0x2c] sm:$0xf]
    %v645 = vld [vmem:[#allocation4 + $0x30] sm:$0xf]
    %v646 = vld [vmem:[#allocation4 + $0x34] sm:$0xf]
    %v647 = vld [vmem:[#allocation4 + $0x38] sm:$0xf]
    %v648 = vld [vmem:[#allocation4 + $0x3c] sm:$0xf]
    %v649 = vld [vmem:[#allocation4 + $0x40] sm:$0xf]
    %v650 = vld [vmem:[#allocation4 + $0x44] sm:$0xf]
    %v651 = vld [vmem:[#allocation4 + $0x48] sm:$0xf]
    %v652 = vld [vmem:[#allocation4 + $0x4c] sm:$0xf]
    %v653 = vld [vmem:[#allocation4 + $0x50] sm:$0xf]
    %v654 = vld [vmem:[#allocation4 + $0x54] sm:$0xf]
    %v655 = vld [vmem:[#allocation4 + $0x58] sm:$0xf]
    %v656 = vld [vmem:[#allocation4 + $0x5c] sm:$0xf]
    %v657 = vld [vmem:[#allocation4 + $0x60] sm:$0xf]
    %v658 = vld [vmem:[#allocation4 + $0x64] sm:$0xf]
    %v659 = vld [vmem:[#allocation4 + $0x68] sm:$0xf]
    %v660 = vld [vmem:[#allocation4 + $0x6c] sm:$0xf]
    %v661 = vld [vmem:[#allocation4 + $0x70] sm:$0xf]
    %v662 = vld [vmem:[#allocation4 + $0x74] sm:$0xf]
    %v663 = vld [vmem:[#allocation4 + $0x78] sm:$0xf]
    %v664 = vld [vmem:[#allocation4 + $0x7c] sm:$0xf]
    %v697 = vunpack.c.l.b16 %v633
    %v698 = vunpack.c.l.b16 %v634
    %v699 = vunpack.c.l.b16 %v635
    %v700 = vunpack.c.l.b16 %v636
    %v701 = vunpack.c.l.b16 %v637
    %v702 = vunpack.c.l.b16 %v638
    %v703 = vunpack.c.l.b16 %v639
    %v704 = vunpack.c.l.b16 %v640
    %v705 = vunpack.c.l.b16 %v641
    %v706 = vunpack.c.l.b16 %v642
    %v707 = vunpack.c.l.b16 %v643
    %v708 = vunpack.c.l.b16 %v644
    %v709 = vunpack.c.l.b16 %v645
    %v710 = vunpack.c.l.b16 %v646
    %v711 = vunpack.c.l.b16 %v647
    %v712 = vunpack.c.l.b16 %v648
    %v713 = vunpack.c.l.b16 %v649
    %v714 = vunpack.c.l.b16 %v650
    %v715 = vunpack.c.l.b16 %v651
    %v716 = vunpack.c.l.b16 %v652
    %v717 = vunpack.c.l.b16 %v653
    %v718 = vunpack.c.l.b16 %v654
    %v719 = vunpack.c.l.b16 %v655
    %v720 = vunpack.c.l.b16 %v656
    %v721 = vunpack.c.l.b16 %v657
    %v722 = vunpack.c.l.b16 %v658
    %v723 = vunpack.c.l.b16 %v659
    %v724 = vunpack.c.l.b16 %v660
    %v725 = vunpack.c.l.b16 %v661
    %v726 = vunpack.c.l.b16 %v662
    %v727 = vunpack.c.l.b16 %v663
    %v728 = vunpack.c.l.b16 %v664
    %v729 = vpack.c.b16 %v698, %v697
    %v730 = vpack.c.b16 %v700, %v699
    %v731 = vpack.c.b16 %v702, %v701
    %v732 = vpack.c.b16 %v704, %v703
    %v733 = vpack.c.b16 %v706, %v705
    %v734 = vpack.c.b16 %v708, %v707
    %v735 = vpack.c.b16 %v710, %v709
    %v736 = vpack.c.b16 %v712, %v711
    %v737 = vpack.c.b16 %v714, %v713
    %v738 = vpack.c.b16 %v716, %v715
    %v739 = vpack.c.b16 %v718, %v717
    %v740 = vpack.c.b16 %v720, %v719
    %v741 = vpack.c.b16 %v722, %v721
    %v742 = vpack.c.b16 %v724, %v723
    %v743 = vpack.c.b16 %v726, %v725
    %v744 = vpack.c.b16 %v728, %v727
    %761 = vmatprep.subr.bf16.mxu0 0
    %762 = vmatpush1.bf16.msra.mxu0 %v729
    %763 = vmatprep.subr.bf16.mxu0 0
    %764 = vmatpush1.bf16.msra.mxu0 %v730
    %765 = vmatprep.subr.bf16.mxu0 0
    %766 = vmatpush1.bf16.msra.mxu0 %v731
    %767 = vmatprep.subr.bf16.mxu0 0
    %768 = vmatpush1.bf16.msra.mxu0 %v732
    %769 = vmatprep.subr.bf16.mxu0 0
    %770 = vmatpush1.bf16.msra.mxu0 %v733
    %771 = vmatprep.subr.bf16.mxu0 0
    %772 = vmatpush1.bf16.msra.mxu0 %v734
    %773 = vmatprep.subr.bf16.mxu0 0
    %774 = vmatpush1.bf16.msra.mxu0 %v735
    %775 = vmatprep.subr.bf16.mxu0 0
    %776 = vmatpush1.bf16.msra.mxu0 %v736
    %777 = vmatprep.subr.bf16.mxu0 0
    %778 = vmatpush1.bf16.msra.mxu0 %v737
    %779 = vmatprep.subr.bf16.mxu0 0
    %780 = vmatpush1.bf16.msra.mxu0 %v738
    %781 = vmatprep.subr.bf16.mxu0 0
    %782 = vmatpush1.bf16.msra.mxu0 %v739
    %783 = vmatprep.subr.bf16.mxu0 0
    %784 = vmatpush1.bf16.msra.mxu0 %v740
    %785 = vmatprep.subr.bf16.mxu0 0
    %786 = vmatpush1.bf16.msra.mxu0 %v741
    %787 = vmatprep.subr.bf16.mxu0 0
    %788 = vmatpush1.bf16.msra.mxu0 %v742
    %789 = vmatprep.subr.bf16.mxu0 0
    %790 = vmatpush1.bf16.msra.mxu0 %v743
    %791 = vmatprep.subr.bf16.mxu0 0
    %792 = vmatpush1.bf16.msra.mxu0 %v744
    %793 = vmatprep.mubr.bf16.mxu0 %v631
    %794 = vmatmul.mubr.bf16.gmra.mrb[0].mxu0 %v452
    %v795 = vpop.f32.mrb[0].mxu0
    %v796 = vadd.f32 0.0, %v795
    %v797 = vpop.f32.mrb[0].mxu0
    %v798 = vpop.f32.mrb[0].mxu0
    %v799 = vadd.f32 0.0, %v798
    %v800 = vpop.f32.mrb[0].mxu0
    %801 = vmatprep.mubr.bf16.mxu0 %v632
    %802 = vmatmul.mubr.bf16.gmra.mrb[0].mxu0 %v453
    %v803 = vpop.f32.mrb[0].mxu0
    %v804 = vadd.f32 0.0, %v803
    %v805 = vpop.f32.mrb[0].mxu0
    %v806 = vpop.f32.mrb[0].mxu0
    %v807 = vadd.f32 0.0, %v806
    %v808 = vpop.f32.mrb[0].mxu0
    %809 = vdwg.mxu0
    %v810 = vld [vmem:[%s4] sm:$0x1]
    %v811 = vld [vmem:[%s4 + $0x1] sm:$0x1]
    %v812 = vadd.f32 %v796, %v799
    %v813 = vadd.f32 %v812, %v804
    %v814 = vadd.f32 %v813, %v807
    %v815 = vrot.slane %v814, 4
    %v816 = vadd.f32 %v814, %v815
    %v817 = vrot.slane %v816, 2
    %v818 = vadd.f32 %v816, %v817
    %v819 = vrot.slane %v818, 1
    %v820 = vadd.f32 %v818, %v819
    %v821 = vrcp.pop 32.0
    %v822 = vmul.f32 %v820, %v821
    %v823 = vsub.f32 %v796, %v822
    %v824 = vsub.f32 %v799, %v822
    %v825 = vsub.f32 %v804, %v822
    %v826 = vsub.f32 %v807, %v822
    %v827 = vmul.f32 %v823, %v823
    %v828 = vmul.f32 %v824, %v824
    %v829 = vmul.f32 %v825, %v825
    %v830 = vmul.f32 %v826, %v826
    %v831 = vadd.f32 %v827, %v828
    %v832 = vadd.f32 %v831, %v829
    %v833 = vadd.f32 %v832, %v830
    %v834 = vrot.slane %v833, 4
    %v835 = vadd.f32 %v833, %v834
    %v836 = vrot.slane %v835, 2
    %v837 = vadd.f32 %v835, %v836
    %v838 = vrot.slane %v837, 1
    %v839 = vadd.f32 %v837, %v838
    %v840 = vmul.f32 %v839, %v821
    %v841 = vlaneseq
    %v842 = vshrl.u32 %v841, 7
    %v843 = vsub.s32 0, %v842
    %v844 = vrot.slane %v810, %v843
    %v845 = vmul.f32 %v844, %v823
    %v846 = vmul.f32 %v844, %v824
    %v847 = vmul.f32 %v844, %v825
    %v848 = vmul.f32 %v844, %v826
    %v849 = vadd.f32 %v840, 1.0
    %v850 = vrsqrt.pop %v849
    %v851 = vmul.f32 %v845, %v850
    %v852 = vmul.f32 %v846, %v850
    %v853 = vmul.f32 %v847, %v850
    %v854 = vmul.f32 %v848, %v850
    %v855 = vlaneseq
    %v856 = vshrl.u32 %v855, 7
    %v857 = vsub.s32 0, %v856
    %v858 = vrot.slane %v811, %v857
    %v859 = vadd.f32 %v851, %v858
    %v860 = vadd.f32 %v852, %v858
    %v861 = vadd.f32 %v853, %v858
    %v862 = vadd.f32 %v854, %v858
    %vm863 = vcmp.gt.f32.partialorder %v859, 0.0
    %vm864 = vcmp.gt.f32.partialorder %v860, 0.0
    %vm865 = vcmp.gt.f32.partialorder %v861, 0.0
    %vm866 = vcmp.gt.f32.partialorder %v862, 0.0
    %v867 = vmul.f32 %v859, 0.01
    %v868 = vmul.f32 %v860, 0.01
    %v869 = vmul.f32 %v861, 0.01
    %v870 = vmul.f32 %v862, 0.01
    %v871 = vsel %vm863, %v859, %v867
    %v872 = vsel %vm864, %v860, %v868
    %v873 = vsel %vm865, %v861, %v869
    %v874 = vsel %vm866, %v862, %v870
    %v875 = vpack.c.bf16 %v872, %v871
    %v876 = vpack.c.bf16 %v874, %v873
    %v877 = vld [vmem:[#allocation2 + $0x100] sm:$0xf]
    %v878 = vld [vmem:[#allocation2 + $0x104] sm:$0xf]
    %v879 = vld [vmem:[#allocation2 + $0x108] sm:$0xf]
    %v880 = vld [vmem:[#allocation2 + $0x10c] sm:$0xf]
    %v881 = vld [vmem:[#allocation2 + $0x110] sm:$0xf]
    %v882 = vld [vmem:[#allocation2 + $0x114] sm:$0xf]
    %v883 = vld [vmem:[#allocation2 + $0x118] sm:$0xf]
    %v884 = vld [vmem:[#allocation2 + $0x11c] sm:$0xf]
    %v885 = vld [vmem:[#allocation2 + $0x120] sm:$0xf]
    %v886 = vld [vmem:[#allocation2 + $0x124] sm:$0xf]
    %v887 = vld [vmem:[#allocation2 + $0x128] sm:$0xf]
    %v888 = vld [vmem:[#allocation2 + $0x12c] sm:$0xf]
    %v889 = vld [vmem:[#allocation2 + $0x130] sm:$0xf]
    %v890 = vld [vmem:[#allocation2 + $0x134] sm:$0xf]
    %v891 = vld [vmem:[#allocation2 + $0x138] sm:$0xf]
    %v892 = vld [vmem:[#allocation2 + $0x13c] sm:$0xf]
    %v893 = vld [vmem:[#allocation2 + $0x140] sm:$0xf]
    %v894 = vld [vmem:[#allocation2 + $0x144] sm:$0xf]
    %v895 = vld [vmem:[#allocation2 + $0x148] sm:$0xf]
    %v896 = vld [vmem:[#allocation2 + $0x14c] sm:$0xf]
    %v897 = vld [vmem:[#allocation2 + $0x150] sm:$0xf]
    %v898 = vld [vmem:[#allocation2 + $0x154] sm:$0xf]
    %v899 = vld [vmem:[#allocation2 + $0x158] sm:$0xf]
    %v900 = vld [vmem:[#allocation2 + $0x15c] sm:$0xf]
    %v901 = vld [vmem:[#allocation2 + $0x160] sm:$0xf]
    %v902 = vld [vmem:[#allocation2 + $0x164] sm:$0xf]
    %v903 = vld [vmem:[#allocation2 + $0x168] sm:$0xf]
    %v904 = vld [vmem:[#allocation2 + $0x16c] sm:$0xf]
    %v905 = vld [vmem:[#allocation2 + $0x170] sm:$0xf]
    %v906 = vld [vmem:[#allocation2 + $0x174] sm:$0xf]
    %v907 = vld [vmem:[#allocation2 + $0x178] sm:$0xf]
    %v908 = vld [vmem:[#allocation2 + $0x17c] sm:$0xf]
    %v941 = vunpack.c.l.b16 %v877
    %v942 = vunpack.c.l.b16 %v878
    %v943 = vunpack.c.l.b16 %v879
    %v944 = vunpack.c.l.b16 %v880
    %v945 = vunpack.c.l.b16 %v881
    %v946 = vunpack.c.l.b16 %v882
    %v947 = vunpack.c.l.b16 %v883
    %v948 = vunpack.c.l.b16 %v884
    %v949 = vunpack.c.l.b16 %v885
    %v950 = vunpack.c.l.b16 %v886
    %v951 = vunpack.c.l.b16 %v887
    %v952 = vunpack.c.l.b16 %v888
    %v953 = vunpack.c.l.b16 %v889
    %v954 = vunpack.c.l.b16 %v890
    %v955 = vunpack.c.l.b16 %v891
    %v956 = vunpack.c.l.b16 %v892
    %v957 = vunpack.c.l.b16 %v893
    %v958 = vunpack.c.l.b16 %v894
    %v959 = vunpack.c.l.b16 %v895
    %v960 = vunpack.c.l.b16 %v896
    %v961 = vunpack.c.l.b16 %v897
    %v962 = vunpack.c.l.b16 %v898
    %v963 = vunpack.c.l.b16 %v899
    %v964 = vunpack.c.l.b16 %v900
    %v965 = vunpack.c.l.b16 %v901
    %v966 = vunpack.c.l.b16 %v902
    %v967 = vunpack.c.l.b16 %v903
    %v968 = vunpack.c.l.b16 %v904
    %v969 = vunpack.c.l.b16 %v905
    %v970 = vunpack.c.l.b16 %v906
    %v971 = vunpack.c.l.b16 %v907
    %v972 = vunpack.c.l.b16 %v908
    %v973 = vpack.c.b16 %v942, %v941
    %v974 = vpack.c.b16 %v944, %v943
    %v975 = vpack.c.b16 %v946, %v945
    %v976 = vpack.c.b16 %v948, %v947
    %v977 = vpack.c.b16 %v950, %v949
    %v978 = vpack.c.b16 %v952, %v951
    %v979 = vpack.c.b16 %v954, %v953
    %v980 = vpack.c.b16 %v956, %v955
    %v981 = vpack.c.b16 %v958, %v957
    %v982 = vpack.c.b16 %v960, %v959
    %v983 = vpack.c.b16 %v962, %v961
    %v984 = vpack.c.b16 %v964, %v963
    %v985 = vpack.c.b16 %v966, %v965
    %v986 = vpack.c.b16 %v968, %v967
    %v987 = vpack.c.b16 %v970, %v969
    %v988 = vpack.c.b16 %v972, %v971
    %1005 = vmatprep.subr.bf16.mxu0 0
    %1006 = vmatpush1.bf16.msra.mxu0 %v973
    %1007 = vmatprep.subr.bf16.mxu0 0
    %1008 = vmatpush1.bf16.msra.mxu0 %v974
    %1009 = vmatprep.subr.bf16.mxu0 0
    %1010 = vmatpush1.bf16.msra.mxu0 %v975
    %1011 = vmatprep.subr.bf16.mxu0 0
    %1012 = vmatpush1.bf16.msra.mxu0 %v976
    %1013 = vmatprep.subr.bf16.mxu0 0
    %1014 = vmatpush1.bf16.msra.mxu0 %v977
    %1015 = vmatprep.subr.bf16.mxu0 0
    %1016 = vmatpush1.bf16.msra.mxu0 %v978
    %1017 = vmatprep.subr.bf16.mxu0 0
    %1018 = vmatpush1.bf16.msra.mxu0 %v979
    %1019 = vmatprep.subr.bf16.mxu0 0
    %1020 = vmatpush1.bf16.msra.mxu0 %v980
    %1021 = vmatprep.subr.bf16.mxu0 0
    %1022 = vmatpush1.bf16.msra.mxu0 %v981
    %1023 = vmatprep.subr.bf16.mxu0 0
    %1024 = vmatpush1.bf16.msra.mxu0 %v982
    %1025 = vmatprep.subr.bf16.mxu0 0
    %1026 = vmatpush1.bf16.msra.mxu0 %v983
    %1027 = vmatprep.subr.bf16.mxu0 0
    %1028 = vmatpush1.bf16.msra.mxu0 %v984
    %1029 = vmatprep.subr.bf16.mxu0 0
    %1030 = vmatpush1.bf16.msra.mxu0 %v985
    %1031 = vmatprep.subr.bf16.mxu0 0
    %1032 = vmatpush1.bf16.msra.mxu0 %v986
    %1033 = vmatprep.subr.bf16.mxu0 0
    %1034 = vmatpush1.bf16.msra.mxu0 %v987
    %1035 = vmatprep.subr.bf16.mxu0 0
    %1036 = vmatpush1.bf16.msra.mxu0 %v988
    %1037 = vmatprep.mubr.bf16.mxu0 %v260
    %1038 = vmatmul.mubr.bf16.gmra.mrb[0].mxu0 %v137
    %v1039 = vpop.f32.mrb[0].mxu0
    %v1040 = vadd.f32 0.0, %v1039
    %v1041 = vpop.f32.mrb[0].mxu0
    %v1042 = vpop.f32.mrb[0].mxu0
    %v1043 = vadd.f32 0.0, %v1042
    %v1044 = vpop.f32.mrb[0].mxu0
    %1045 = vmatprep.mubr.bf16.mxu0 %v261
    %1046 = vmatmul.mubr.bf16.gmra.mrb[0].mxu0 %v138
    %v1047 = vpop.f32.mrb[0].mxu0
    %v1048 = vadd.f32 0.0, %v1047
    %v1049 = vpop.f32.mrb[0].mxu0
    %v1050 = vpop.f32.mrb[0].mxu0
    %v1051 = vadd.f32 0.0, %v1050
    %v1052 = vpop.f32.mrb[0].mxu0
    %1053 = vmatprep.mubr.bf16.mxu0 %v262
    %1054 = vmatmul.mubr.bf16.gmra.mrb[0].mxu0 %v139
    %v1055 = vpop.f32.mrb[0].mxu0
    %v1056 = vadd.f32 0.0, %v1055
    %v1057 = vpop.f32.mrb[0].mxu0
    %v1058 = vpop.f32.mrb[0].mxu0
    %v1059 = vadd.f32 0.0, %v1058
    %v1060 = vpop.f32.mrb[0].mxu0
    %1061 = vdwg.mxu0
    %v1062 = vpack.c.bf16 %v1043, %v1040
    %v1063 = vpack.c.bf16 %v1051, %v1048
    %v1064 = vpack.c.bf16 %v1059, %v1056
    %v1065 = vld [vmem:[#allocation4 + $0x80] sm:$0xf]
    %v1066 = vld [vmem:[#allocation4 + $0x84] sm:$0xf]
    %v1067 = vld [vmem:[#allocation4 + $0x88] sm:$0xf]
    %v1068 = vld [vmem:[#allocation4 + $0x8c] sm:$0xf]
    %v1069 = vld [vmem:[#allocation4 + $0x90] sm:$0xf]
    %v1070 = vld [vmem:[#allocation4 + $0x94] sm:$0xf]
    %v1071 = vld [vmem:[#allocation4 + $0x98] sm:$0xf]
    %v1072 = vld [vmem:[#allocation4 + $0x9c] sm:$0xf]
    %v1073 = vld [vmem:[#allocation4 + $0xa0] sm:$0xf]
    %v1074 = vld [vmem:[#allocation4 + $0xa4] sm:$0xf]
    %v1075 = vld [vmem:[#allocation4 + $0xa8] sm:$0xf]
    %v1076 = vld [vmem:[#allocation4 + $0xac] sm:$0xf]
    %v1077 = vld [vmem:[#allocation4 + $0xb0] sm:$0xf]
    %v1078 = vld [vmem:[#allocation4 + $0xb4] sm:$0xf]
    %v1079 = vld [vmem:[#allocation4 + $0xb8] sm:$0xf]
    %v1080 = vld [vmem:[#allocation4 + $0xbc] sm:$0xf]
    %v1097 = vunpack.c.l.b16 %v1065
    %v1098 = vunpack.c.l.b16 %v1066
    %v1099 = vunpack.c.l.b16 %v1067
    %v1100 = vunpack.c.l.b16 %v1068
    %v1101 = vunpack.c.l.b16 %v1069
    %v1102 = vunpack.c.l.b16 %v1070
    %v1103 = vunpack.c.l.b16 %v1071
    %v1104 = vunpack.c.l.b16 %v1072
    %v1105 = vunpack.c.l.b16 %v1073
    %v1106 = vunpack.c.l.b16 %v1074
    %v1107 = vunpack.c.l.b16 %v1075
    %v1108 = vunpack.c.l.b16 %v1076
    %v1109 = vunpack.c.l.b16 %v1077
    %v1110 = vunpack.c.l.b16 %v1078
    %v1111 = vunpack.c.l.b16 %v1079
    %v1112 = vunpack.c.l.b16 %v1080
    %v1113 = vpack.c.b16 %v1098, %v1097
    %v1114 = vpack.c.b16 %v1100, %v1099
    %v1115 = vpack.c.b16 %v1102, %v1101
    %v1116 = vpack.c.b16 %v1104, %v1103
    %v1117 = vpack.c.b16 %v1106, %v1105
    %v1118 = vpack.c.b16 %v1108, %v1107
    %v1119 = vpack.c.b16 %v1110, %v1109
    %v1120 = vpack.c.b16 %v1112, %v1111
    %1129 = vmatprep.subr.bf16.mxu0 0
    %1130 = vmatpush1.bf16.msra.mxu0 %v1113
    %1131 = vmatprep.subr.bf16.mxu0 0
    %1132 = vmatpush1.bf16.msra.mxu0 %v1114
    %1133 = vmatprep.subr.bf16.mxu0 0
    %1134 = vmatpush1.bf16.msra.mxu0 %v1115
    %1135 = vmatprep.subr.bf16.mxu0 0
    %1136 = vmatpush1.bf16.msra.mxu0 %v1116
    %1137 = vmatprep.subr.bf16.mxu0 0
    %1138 = vmatpush1.bf16.msra.mxu0 %v1117
    %1139 = vmatprep.subr.bf16.mxu0 0
    %1140 = vmatpush1.bf16.msra.mxu0 %v1118
    %1141 = vmatprep.subr.bf16.mxu0 0
    %1142 = vmatpush1.bf16.msra.mxu0 %v1119
    %1143 = vmatprep.subr.bf16.mxu0 0
    %1144 = vmatpush1.bf16.msra.mxu0 %v1120
    %1145 = vmatprep.subr.bf16.mxu0 0
    %1146 = vmatpush1.bf16.msra.mxu0 0
    %1147 = vmatprep.subr.bf16.mxu0 0
    %1148 = vmatpush1.bf16.msra.mxu0 0
    %1149 = vmatprep.subr.bf16.mxu0 0
    %1150 = vmatpush1.bf16.msra.mxu0 0
    %1151 = vmatprep.subr.bf16.mxu0 0
    %1152 = vmatpush1.bf16.msra.mxu0 0
    %1153 = vmatprep.subr.bf16.mxu0 0
    %1154 = vmatpush1.bf16.msra.mxu0 0
    %1155 = vmatprep.subr.bf16.mxu0 0
    %1156 = vmatpush1.bf16.msra.mxu0 0
    %1157 = vmatprep.subr.bf16.mxu0 0
    %1158 = vmatpush1.bf16.msra.mxu0 0
    %1159 = vmatprep.subr.bf16.mxu0 0
    %1160 = vmatpush1.bf16.msra.mxu0 0
    %1161 = vmatprep.mubr.bf16.mxu0 0
    %1162 = vmatmul.mubr.bf16.gmra.mrb[0].mxu0 %v1062
    %v1163 = vpop.f32.mrb[0].mxu0
    %v1164 = vadd.f32 0.0, %v1163
    %v1165 = vpop.f32.mrb[0].mxu0
    %v1166 = vpop.f32.mrb[0].mxu0
    %v1167 = vadd.f32 0.0, %v1166
    %v1168 = vpop.f32.mrb[0].mxu0
    %1169 = vmatprep.mubr.bf16.mxu0 0
    %1170 = vmatmul.mubr.bf16.gmra.mrb[0].mxu0 %v1063
    %v1171 = vpop.f32.mrb[0].mxu0
    %v1172 = vadd.f32 0.0, %v1171
    %v1173 = vpop.f32.mrb[0].mxu0
    %v1174 = vpop.f32.mrb[0].mxu0
    %v1175 = vadd.f32 0.0, %v1174
    %v1176 = vpop.f32.mrb[0].mxu0
    %1177 = vmatprep.mubr.bf16.mxu0 0
    %1178 = vmatmul.mubr.bf16.gmra.mrb[0].mxu0 %v1064
    %v1179 = vpop.f32.mrb[0].mxu0
    %v1180 = vadd.f32 0.0, %v1179
    %v1181 = vpop.f32.mrb[0].mxu0
    %v1182 = vpop.f32.mrb[0].mxu0
    %v1183 = vadd.f32 0.0, %v1182
    %v1184 = vpop.f32.mrb[0].mxu0
    %1185 = vdwg.mxu0
    %v1186 = vld [vmem:[%s4 + $0x2] sm:$0x1]
    %v1187 = vld [vmem:[%s4 + $0x3] sm:$0x1]
    %v1188 = vadd.f32 %v1164, %v1167
    %v1189 = vadd.f32 %v1188, %v1172
    %v1190 = vadd.f32 %v1189, %v1175
    %v1191 = vadd.f32 %v1190, %v1180
    %v1192 = vadd.f32 %v1191, %v1183
    %v1193 = vrot.slane %v1192, 4
    %v1194 = vadd.f32 %v1192, %v1193
    %v1195 = vrot.slane %v1194, 2
    %v1196 = vadd.f32 %v1194, %v1195
    %v1197 = vrot.slane %v1196, 1
    %v1198 = vadd.f32 %v1196, %v1197
    %v1199 = vrcp.pop 48.0
    %v1200 = vmul.f32 %v1198, %v1199
    %v1201 = vsub.f32 %v1164, %v1200
    %v1202 = vsub.f32 %v1167, %v1200
    %v1203 = vsub.f32 %v1172, %v1200
    %v1204 = vsub.f32 %v1175, %v1200
    %v1205 = vsub.f32 %v1180, %v1200
    %v1206 = vsub.f32 %v1183, %v1200
    %v1207 = vmul.f32 %v1201, %v1201
    %v1208 = vmul.f32 %v1202, %v1202
    %v1209 = vmul.f32 %v1203, %v1203
    %v1210 = vmul.f32 %v1204, %v1204
    %v1211 = vmul.f32 %v1205, %v1205
    %v1212 = vmul.f32 %v1206, %v1206
    %v1213 = vadd.f32 %v1207, %v1208
    %v1214 = vadd.f32 %v1213, %v1209
    %v1215 = vadd.f32 %v1214, %v1210
    %v1216 = vadd.f32 %v1215, %v1211
    %v1217 = vadd.f32 %v1216, %v1212
    %v1218 = vrot.slane %v1217, 4
    %v1219 = vadd.f32 %v1217, %v1218
    %v1220 = vrot.slane %v1219, 2
    %v1221 = vadd.f32 %v1219, %v1220
    %v1222 = vrot.slane %v1221, 1
    %v1223 = vadd.f32 %v1221, %v1222
    %v1224 = vmul.f32 %v1223, %v1199
    %v1225 = vlaneseq
    %v1226 = vshrl.u32 %v1225, 7
    %v1227 = vsub.s32 0, %v1226
    %v1228 = vrot.slane %v1186, %v1227
    %v1229 = vmul.f32 %v1228, %v1201
    %v1230 = vmul.f32 %v1228, %v1202
    %v1231 = vmul.f32 %v1228, %v1203
    %v1232 = vmul.f32 %v1228, %v1204
    %v1233 = vmul.f32 %v1228, %v1205
    %v1234 = vmul.f32 %v1228, %v1206
    %v1235 = vadd.f32 %v1224, 1.0
    %v1236 = vrsqrt.pop %v1235
    %v1237 = vmul.f32 %v1229, %v1236
    %v1238 = vmul.f32 %v1230, %v1236
    %v1239 = vmul.f32 %v1231, %v1236
    %v1240 = vmul.f32 %v1232, %v1236
    %v1241 = vmul.f32 %v1233, %v1236
    %v1242 = vmul.f32 %v1234, %v1236
    %v1243 = vlaneseq
    %v1244 = vshrl.u32 %v1243, 7
    %v1245 = vsub.s32 0, %v1244
    %v1246 = vrot.slane %v1187, %v1245
    %v1247 = vadd.f32 %v1237, %v1246
    %v1248 = vadd.f32 %v1238, %v1246
    %v1249 = vadd.f32 %v1239, %v1246
    %v1250 = vadd.f32 %v1240, %v1246
    %v1251 = vadd.f32 %v1241, %v1246
    %v1252 = vadd.f32 %v1242, %v1246
    %vm1253 = vcmp.gt.f32.partialorder %v1247, 0.0
    %vm1254 = vcmp.gt.f32.partialorder %v1248, 0.0
    %vm1255 = vcmp.gt.f32.partialorder %v1249, 0.0
    %vm1256 = vcmp.gt.f32.partialorder %v1250, 0.0
    %vm1257 = vcmp.gt.f32.partialorder %v1251, 0.0
    %vm1258 = vcmp.gt.f32.partialorder %v1252, 0.0
    %v1259 = vmul.f32 %v1247, 0.01
    %v1260 = vmul.f32 %v1248, 0.01
    %v1261 = vmul.f32 %v1249, 0.01
    %v1262 = vmul.f32 %v1250, 0.01
    %v1263 = vmul.f32 %v1251, 0.01
    %v1264 = vmul.f32 %v1252, 0.01
    %v1265 = vsel %vm1253, %v1247, %v1259
    %v1266 = vsel %vm1254, %v1248, %v1260
    %v1267 = vsel %vm1255, %v1249, %v1261
    %v1268 = vsel %vm1256, %v1250, %v1262
    %v1269 = vsel %vm1257, %v1251, %v1263
    %v1270 = vsel %vm1258, %v1252, %v1264
    %v1271 = vpack.c.bf16 %v1266, %v1265
    %v1272 = vpack.c.bf16 %v1268, %v1267
    %v1273 = vpack.c.bf16 %v1270, %v1269
    %1274 = vmatprep.subr.bf16.mxu0 0
    %1275 = vmatpush1.bf16.msra.mxu0 %v875
    %1276 = vmatprep.subr.bf16.mxu0 0
    %1277 = vmatpush1.bf16.msra.mxu0 %v876
    %1278 = vmatprep.subr.bf16.mxu0 0
    %1279 = vmatpush1.bf16.msra.mxu0 %v1271
    %1280 = vmatprep.subr.bf16.mxu0 0
    %1281 = vmatpush1.bf16.msra.mxu0 %v1272
    %1282 = vmatprep.subr.bf16.mxu0 0
    %1283 = vmatpush1.bf16.msra.mxu0 %v1273
    %1284 = vmatprep.subr.bf16.mxu0 0
    %1285 = vmatpush1.bf16.msra.mxu0 0
    %1286 = vmatprep.subr.bf16.mxu0 0
    %1287 = vmatpush1.bf16.msra.mxu0 0
    %1288 = vmatprep.subr.bf16.mxu0 0
    %1289 = vmatpush1.bf16.msra.mxu0 0
    %1290 = vmatprep.subr.bf16.mxu0 0
    %1291 = vmatpush1.bf16.msra.mxu0 0
    %1292 = vmatprep.subr.bf16.mxu0 0
    %1293 = vmatpush1.bf16.msra.mxu0 0
    %1294 = vmatprep.subr.bf16.mxu0 0
    %1295 = vmatpush1.bf16.msra.mxu0 0
    %1296 = vmatprep.subr.bf16.mxu0 0
    %1297 = vmatpush1.bf16.msra.mxu0 0
    %1298 = vmatprep.subr.bf16.mxu0 0
    %1299 = vmatpush1.bf16.msra.mxu0 0
    %1300 = vmatprep.subr.bf16.mxu0 0
    %1301 = vmatpush1.bf16.msra.mxu0 0
    %1302 = vmatprep.subr.bf16.mxu0 0
    %1303 = vmatpush1.bf16.msra.mxu0 0
    %1304 = vmatprep.subr.bf16.mxu0 0
    %1305 = vmatpush1.bf16.msra.mxu0 0
    %1306 = vmatprep.mubr.bf16.mxu0 0
    %1307 = vmatmul.mubr.bf16.gmra.mrb[0].mxu0 %v147
    %v1308 = vpop.f32.mrb[0].mxu0
    %v1309 = vadd.f32 0.0, %v1308
    %v1310 = vpop.f32.mrb[0].mxu0
    %v1311 = vpop.f32.mrb[0].mxu0
    %v1312 = vadd.f32 0.0, %v1311
    %v1313 = vpop.f32.mrb[0].mxu0
    %1314 = vmatprep.mubr.bf16.mxu0 0
    %1315 = vmatmul.mubr.bf16.gmra.mrb[0].mxu0 %v150
    %v1316 = vpop.f32.mrb[0].mxu0
    %v1317 = vadd.f32 0.0, %v1316
    %v1318 = vpop.f32.mrb[0].mxu0
    %v1319 = vpop.f32.mrb[0].mxu0
    %v1320 = vadd.f32 0.0, %v1319
    %v1321 = vpop.f32.mrb[0].mxu0
    %1322 = vmatprep.mubr.bf16.mxu0 0
    %1323 = vmatmul.mubr.bf16.gmra.mrb[0].mxu0 %v153
    %v1324 = vpop.f32.mrb[0].mxu0
    %v1325 = vadd.f32 0.0, %v1324
    %v1326 = vpop.f32.mrb[0].mxu0
    %v1327 = vpop.f32.mrb[0].mxu0
    %v1328 = vadd.f32 0.0, %v1327
    %v1329 = vpop.f32.mrb[0].mxu0
    %1330 = vmatprep.mubr.bf16.mxu0 0
    %1331 = vmatmul.mubr.bf16.gmra.mrb[0].mxu0 %v156
    %v1332 = vpop.f32.mrb[0].mxu0
    %v1333 = vadd.f32 0.0, %v1332
    %v1334 = vpop.f32.mrb[0].mxu0
    %v1335 = vpop.f32.mrb[0].mxu0
    %v1336 = vadd.f32 0.0, %v1335
    %v1337 = vpop.f32.mrb[0].mxu0
    %1338 = vmatprep.mubr.bf16.mxu0 0
    %1339 = vmatmul.mubr.bf16.gmra.mrb[0].mxu0 %v159
    %v1340 = vpop.f32.mrb[0].mxu0
    %v1341 = vpop.f32.mrb[0].mxu0
    %v1342 = vpop.f32.mrb[0].mxu0
    %v1343 = vpop.f32.mrb[0].mxu0
    %1344 = vmatprep.mubr.bf16.mxu0 0
    %1345 = vmatmul.mubr.bf16.gmra.mrb[0].mxu0 %v162
    %v1346 = vpop.f32.mrb[0].mxu0
    %v1347 = vpop.f32.mrb[0].mxu0
    %v1348 = vpop.f32.mrb[0].mxu0
    %v1349 = vpop.f32.mrb[0].mxu0
    %1350 = vmatprep.mubr.bf16.mxu0 0
    %1351 = vmatmul.mubr.bf16.gmra.mrb[0].mxu0 %v165
    %v1352 = vpop.f32.mrb[0].mxu0
    %v1353 = vpop.f32.mrb[0].mxu0
    %v1354 = vpop.f32.mrb[0].mxu0
    %v1355 = vpop.f32.mrb[0].mxu0
    %1356 = vdwg.mxu0
    %v1357 = vpack.c.bf16 %v1312, %v1309
    %v1358 = vpack.c.bf16 %v1320, %v1317
    %v1359 = vpack.c.bf16 %v1328, %v1325
    %v1360 = vpack.c.bf16 %v1336, %v1333
    %v1361 = vld [vmem:[#allocation2 + $0x180] sm:$0xf]
    %v1362 = vld [vmem:[#allocation2 + $0x184] sm:$0xf]
    %v1363 = vld [vmem:[#allocation2 + $0x188] sm:$0xf]
    %v1364 = vld [vmem:[#allocation2 + $0x18c] sm:$0xf]
    %v1365 = vld [vmem:[#allocation2 + $0x190] sm:$0xf]
    %v1366 = vld [vmem:[#allocation2 + $0x194] sm:$0xf]
    %v1367 = vld [vmem:[#allocation2 + $0x198] sm:$0xf]
    %v1368 = vld [vmem:[#allocation2 + $0x19c] sm:$0xf]
    %v1369 = vld [vmem:[#allocation2 + $0x1a0] sm:$0xf]
    %v1370 = vld [vmem:[#allocation2 + $0x1a4] sm:$0xf]
    %v1371 = vld [vmem:[#allocation2 + $0x1a8] sm:$0xf]
    %v1372 = vld [vmem:[#allocation2 + $0x1ac] sm:$0xf]
    %v1373 = vld [vmem:[#allocation2 + $0x1b0] sm:$0xf]
    %v1374 = vld [vmem:[#allocation2 + $0x1b4] sm:$0xf]
    %v1375 = vld [vmem:[#allocation2 + $0x1b8] sm:$0xf]
    %v1376 = vld [vmem:[#allocation2 + $0x1bc] sm:$0xf]
    %v1377 = vld [vmem:[#allocation2 + $0x1c0] sm:$0xf]
    %v1378 = vld [vmem:[#allocation2 + $0x1c4] sm:$0xf]
    %v1379 = vld [vmem:[#allocation2 + $0x1c8] sm:$0xf]
    %v1380 = vld [vmem:[#allocation2 + $0x1cc] sm:$0xf]
    %v1381 = vld [vmem:[#allocation2 + $0x1d0] sm:$0xf]
    %v1382 = vld [vmem:[#allocation2 + $0x1d4] sm:$0xf]
    %v1383 = vld [vmem:[#allocation2 + $0x1d8] sm:$0xf]
    %v1384 = vld [vmem:[#allocation2 + $0x1dc] sm:$0xf]
    %v1385 = vld [vmem:[#allocation2 + $0x1e0] sm:$0xf]
    %v1386 = vld [vmem:[#allocation2 + $0x1e4] sm:$0xf]
    %v1387 = vld [vmem:[#allocation2 + $0x1e8] sm:$0xf]
    %v1388 = vld [vmem:[#allocation2 + $0x1ec] sm:$0xf]
    %v1389 = vld [vmem:[#allocation2 + $0x1f0] sm:$0xf]
    %v1390 = vld [vmem:[#allocation2 + $0x1f4] sm:$0xf]
    %v1391 = vld [vmem:[#allocation2 + $0x1f8] sm:$0xf]
    %v1392 = vld [vmem:[#allocation2 + $0x1fc] sm:$0xf]
    %v1425 = vunpack.c.l.b16 %v1361
    %v1426 = vunpack.c.l.b16 %v1362
    %v1427 = vunpack.c.l.b16 %v1363
    %v1428 = vunpack.c.l.b16 %v1364
    %v1429 = vunpack.c.l.b16 %v1365
    %v1430 = vunpack.c.l.b16 %v1366
    %v1431 = vunpack.c.l.b16 %v1367
    %v1432 = vunpack.c.l.b16 %v1368
    %v1433 = vunpack.c.l.b16 %v1369
    %v1434 = vunpack.c.l.b16 %v1370
    %v1435 = vunpack.c.l.b16 %v1371
    %v1436 = vunpack.c.l.b16 %v1372
    %v1437 = vunpack.c.l.b16 %v1373
    %v1438 = vunpack.c.l.b16 %v1374
    %v1439 = vunpack.c.l.b16 %v1375
    %v1440 = vunpack.c.l.b16 %v1376
    %v1441 = vunpack.c.l.b16 %v1377
    %v1442 = vunpack.c.l.b16 %v1378
    %v1443 = vunpack.c.l.b16 %v1379
    %v1444 = vunpack.c.l.b16 %v1380
    %v1445 = vunpack.c.l.b16 %v1381
    %v1446 = vunpack.c.l.b16 %v1382
    %v1447 = vunpack.c.l.b16 %v1383
    %v1448 = vunpack.c.l.b16 %v1384
    %v1449 = vunpack.c.l.b16 %v1385
    %v1450 = vunpack.c.l.b16 %v1386
    %v1451 = vunpack.c.l.b16 %v1387
    %v1452 = vunpack.c.l.b16 %v1388
    %v1453 = vunpack.c.l.b16 %v1389
    %v1454 = vunpack.c.l.b16 %v1390
    %v1455 = vunpack.c.l.b16 %v1391
    %v1456 = vunpack.c.l.b16 %v1392
    %v1457 = vpack.c.b16 %v1426, %v1425
    %v1458 = vpack.c.b16 %v1428, %v1427
    %v1459 = vpack.c.b16 %v1430, %v1429
    %v1460 = vpack.c.b16 %v1432, %v1431
    %v1461 = vpack.c.b16 %v1434, %v1433
    %v1462 = vpack.c.b16 %v1436, %v1435
    %v1463 = vpack.c.b16 %v1438, %v1437
    %v1464 = vpack.c.b16 %v1440, %v1439
    %v1465 = vpack.c.b16 %v1442, %v1441
    %v1466 = vpack.c.b16 %v1444, %v1443
    %v1467 = vpack.c.b16 %v1446, %v1445
    %v1468 = vpack.c.b16 %v1448, %v1447
    %v1469 = vpack.c.b16 %v1450, %v1449
    %v1470 = vpack.c.b16 %v1452, %v1451
    %v1471 = vpack.c.b16 %v1454, %v1453
    %v1472 = vpack.c.b16 %v1456, %v1455
    %1489 = vmatprep.subr.bf16.mxu0 0
    %1490 = vmatpush1.bf16.msra.mxu0 %v1457
    %1491 = vmatprep.subr.bf16.mxu0 0
    %1492 = vmatpush1.bf16.msra.mxu0 %v1458
    %1493 = vmatprep.subr.bf16.mxu0 0
    %1494 = vmatpush1.bf16.msra.mxu0 %v1459
    %1495 = vmatprep.subr.bf16.mxu0 0
    %1496 = vmatpush1.bf16.msra.mxu0 %v1460
    %1497 = vmatprep.subr.bf16.mxu0 0
    %1498 = vmatpush1.bf16.msra.mxu0 %v1461
    %1499 = vmatprep.subr.bf16.mxu0 0
    %1500 = vmatpush1.bf16.msra.mxu0 %v1462
    %1501 = vmatprep.subr.bf16.mxu0 0
    %1502 = vmatpush1.bf16.msra.mxu0 %v1463
    %1503 = vmatprep.subr.bf16.mxu0 0
    %1504 = vmatpush1.bf16.msra.mxu0 %v1464
    %1505 = vmatprep.subr.bf16.mxu0 0
    %1506 = vmatpush1.bf16.msra.mxu0 %v1465
    %1507 = vmatprep.subr.bf16.mxu0 0
    %1508 = vmatpush1.bf16.msra.mxu0 %v1466
    %1509 = vmatprep.subr.bf16.mxu0 0
    %1510 = vmatpush1.bf16.msra.mxu0 %v1467
    %1511 = vmatprep.subr.bf16.mxu0 0
    %1512 = vmatpush1.bf16.msra.mxu0 %v1468
    %1513 = vmatprep.subr.bf16.mxu0 0
    %1514 = vmatpush1.bf16.msra.mxu0 %v1469
    %1515 = vmatprep.subr.bf16.mxu0 0
    %1516 = vmatpush1.bf16.msra.mxu0 %v1470
    %1517 = vmatprep.subr.bf16.mxu0 0
    %1518 = vmatpush1.bf16.msra.mxu0 %v1471
    %1519 = vmatprep.subr.bf16.mxu0 0
    %1520 = vmatpush1.bf16.msra.mxu0 %v1472
    %1521 = vmatprep.mubr.bf16.mxu0 %v1357
    %1522 = vmatmul.mubr.bf16.gmra.mrb[0].mxu0 %v875
    %v1523 = vpop.f32.mrb[0].mxu0
    %v1524 = vadd.f32 0.0, %v1523
    %v1525 = vpop.f32.mrb[0].mxu0
    %v1526 = vpop.f32.mrb[0].mxu0
    %v1527 = vadd.f32 0.0, %v1526
    %v1528 = vpop.f32.mrb[0].mxu0
    %1529 = vmatprep.mubr.bf16.mxu0 %v1358
    %1530 = vmatmul.mubr.bf16.gmra.mrb[0].mxu0 %v876
    %v1531 = vpop.f32.mrb[0].mxu0
    %v1532 = vadd.f32 0.0, %v1531
    %v1533 = vpop.f32.mrb[0].mxu0
    %v1534 = vpop.f32.mrb[0].mxu0
    %v1535 = vadd.f32 0.0, %v1534
    %v1536 = vpop.f32.mrb[0].mxu0
    %1537 = vdwg.mxu0
    %v1538 = vpack.c.bf16 %v1527, %v1524
    %v1539 = vpack.c.bf16 %v1535, %v1532
    %v1540 = vld [vmem:[#allocation2 + $0x200] sm:$0xf]
    %v1541 = vld [vmem:[#allocation2 + $0x204] sm:$0xf]
    %v1542 = vld [vmem:[#allocation2 + $0x208] sm:$0xf]
    %v1543 = vld [vmem:[#allocation2 + $0x20c] sm:$0xf]
    %v1544 = vld [vmem:[#allocation2 + $0x210] sm:$0xf]
    %v1545 = vld [vmem:[#allocation2 + $0x214] sm:$0xf]
    %v1546 = vld [vmem:[#allocation2 + $0x218] sm:$0xf]
    %v1547 = vld [vmem:[#allocation2 + $0x21c] sm:$0xf]
    %v1548 = vld [vmem:[#allocation2 + $0x220] sm:$0xf]
    %v1549 = vld [vmem:[#allocation2 + $0x224] sm:$0xf]
    %v1550 = vld [vmem:[#allocation2 + $0x228] sm:$0xf]
    %v1551 = vld [vmem:[#allocation2 + $0x22c] sm:$0xf]
    %v1552 = vld [vmem:[#allocation2 + $0x230] sm:$0xf]
    %v1553 = vld [vmem:[#allocation2 + $0x234] sm:$0xf]
    %v1554 = vld [vmem:[#allocation2 + $0x238] sm:$0xf]
    %v1555 = vld [vmem:[#allocation2 + $0x23c] sm:$0xf]
    %v1556 = vld [vmem:[#allocation2 + $0x240] sm:$0xf]
    %v1557 = vld [vmem:[#allocation2 + $0x244] sm:$0xf]
    %v1558 = vld [vmem:[#allocation2 + $0x248] sm:$0xf]
    %v1559 = vld [vmem:[#allocation2 + $0x24c] sm:$0xf]
    %v1560 = vld [vmem:[#allocation2 + $0x250] sm:$0xf]
    %v1561 = vld [vmem:[#allocation2 + $0x254] sm:$0xf]
    %v1562 = vld [vmem:[#allocation2 + $0x258] sm:$0xf]
    %v1563 = vld [vmem:[#allocation2 + $0x25c] sm:$0xf]
    %v1564 = vld [vmem:[#allocation2 + $0x260] sm:$0xf]
    %v1565 = vld [vmem:[#allocation2 + $0x264] sm:$0xf]
    %v1566 = vld [vmem:[#allocation2 + $0x268] sm:$0xf]
    %v1567 = vld [vmem:[#allocation2 + $0x26c] sm:$0xf]
    %v1568 = vld [vmem:[#allocation2 + $0x270] sm:$0xf]
    %v1569 = vld [vmem:[#allocation2 + $0x274] sm:$0xf]
    %v1570 = vld [vmem:[#allocation2 + $0x278] sm:$0xf]
    %v1571 = vld [vmem:[#allocation2 + $0x27c] sm:$0xf]
    %v1604 = vunpack.c.l.b16 %v1540
    %v1605 = vunpack.c.l.b16 %v1541
    %v1606 = vunpack.c.l.b16 %v1542
    %v1607 = vunpack.c.l.b16 %v1543
    %v1608 = vunpack.c.l.b16 %v1544
    %v1609 = vunpack.c.l.b16 %v1545
    %v1610 = vunpack.c.l.b16 %v1546
    %v1611 = vunpack.c.l.b16 %v1547
    %v1612 = vunpack.c.l.b16 %v1548
    %v1613 = vunpack.c.l.b16 %v1549
    %v1614 = vunpack.c.l.b16 %v1550
    %v1615 = vunpack.c.l.b16 %v1551
    %v1616 = vunpack.c.l.b16 %v1552
    %v1617 = vunpack.c.l.b16 %v1553
    %v1618 = vunpack.c.l.b16 %v1554
    %v1619 = vunpack.c.l.b16 %v1555
    %v1620 = vunpack.c.l.b16 %v1556
    %v1621 = vunpack.c.l.b16 %v1557
    %v1622 = vunpack.c.l.b16 %v1558
    %v1623 = vunpack.c.l.b16 %v1559
    %v1624 = vunpack.c.l.b16 %v1560
    %v1625 = vunpack.c.l.b16 %v1561
    %v1626 = vunpack.c.l.b16 %v1562
    %v1627 = vunpack.c.l.b16 %v1563
    %v1628 = vunpack.c.l.b16 %v1564
    %v1629 = vunpack.c.l.b16 %v1565
    %v1630 = vunpack.c.l.b16 %v1566
    %v1631 = vunpack.c.l.b16 %v1567
    %v1632 = vunpack.c.l.b16 %v1568
    %v1633 = vunpack.c.l.b16 %v1569
    %v1634 = vunpack.c.l.b16 %v1570
    %v1635 = vunpack.c.l.b16 %v1571
    %v1636 = vpack.c.b16 %v1605, %v1604
    %v1637 = vpack.c.b16 %v1607, %v1606
    %v1638 = vpack.c.b16 %v1609, %v1608
    %v1639 = vpack.c.b16 %v1611, %v1610
    %v1640 = vpack.c.b16 %v1613, %v1612
    %v1641 = vpack.c.b16 %v1615, %v1614
    %v1642 = vpack.c.b16 %v1617, %v1616
    %v1643 = vpack.c.b16 %v1619, %v1618
    %v1644 = vpack.c.b16 %v1621, %v1620
    %v1645 = vpack.c.b16 %v1623, %v1622
    %v1646 = vpack.c.b16 %v1625, %v1624
    %v1647 = vpack.c.b16 %v1627, %v1626
    %v1648 = vpack.c.b16 %v1629, %v1628
    %v1649 = vpack.c.b16 %v1631, %v1630
    %v1650 = vpack.c.b16 %v1633, %v1632
    %v1651 = vpack.c.b16 %v1635, %v1634
    %1668 = vmatprep.subr.bf16.mxu0 0
    %1669 = vmatpush1.bf16.msra.mxu0 %v1636
    %1670 = vmatprep.subr.bf16.mxu0 0
    %1671 = vmatpush1.bf16.msra.mxu0 %v1637
    %1672 = vmatprep.subr.bf16.mxu0 0
    %1673 = vmatpush1.bf16.msra.mxu0 %v1638
    %1674 = vmatprep.subr.bf16.mxu0 0
    %1675 = vmatpush1.bf16.msra.mxu0 %v1639
    %1676 = vmatprep.subr.bf16.mxu0 0
    %1677 = vmatpush1.bf16.msra.mxu0 %v1640
    %1678 = vmatprep.subr.bf16.mxu0 0
    %1679 = vmatpush1.bf16.msra.mxu0 %v1641
    %1680 = vmatprep.subr.bf16.mxu0 0
    %1681 = vmatpush1.bf16.msra.mxu0 %v1642
    %1682 = vmatprep.subr.bf16.mxu0 0
    %1683 = vmatpush1.bf16.msra.mxu0 %v1643
    %1684 = vmatprep.subr.bf16.mxu0 0
    %1685 = vmatpush1.bf16.msra.mxu0 %v1644
    %1686 = vmatprep.subr.bf16.mxu0 0
    %1687 = vmatpush1.bf16.msra.mxu0 %v1645
    %1688 = vmatprep.subr.bf16.mxu0 0
    %1689 = vmatpush1.bf16.msra.mxu0 %v1646
    %1690 = vmatprep.subr.bf16.mxu0 0
    %1691 = vmatpush1.bf16.msra.mxu0 %v1647
    %1692 = vmatprep.subr.bf16.mxu0 0
    %1693 = vmatpush1.bf16.msra.mxu0 %v1648
    %1694 = vmatprep.subr.bf16.mxu0 0
    %1695 = vmatpush1.bf16.msra.mxu0 %v1649
    %1696 = vmatprep.subr.bf16.mxu0 0
    %1697 = vmatpush1.bf16.msra.mxu0 %v1650
    %1698 = vmatprep.subr.bf16.mxu0 0
    %1699 = vmatpush1.bf16.msra.mxu0 %v1651
    %1700 = vmatprep.mubr.bf16.mxu0 %v1359
    %1701 = vmatmul.mubr.bf16.gmra.mrb[0].mxu0 %v875
    %v1702 = vpop.f32.mrb[0].mxu0
    %v1703 = vadd.f32 0.0, %v1702
    %v1704 = vpop.f32.mrb[0].mxu0
    %v1705 = vpop.f32.mrb[0].mxu0
    %v1706 = vadd.f32 0.0, %v1705
    %v1707 = vpop.f32.mrb[0].mxu0
    %1708 = vmatprep.mubr.bf16.mxu0 %v1360
    %1709 = vmatmul.mubr.bf16.gmra.mrb[0].mxu0 %v876
    %v1710 = vpop.f32.mrb[0].mxu0
    %v1711 = vadd.f32 0.0, %v1710
    %v1712 = vpop.f32.mrb[0].mxu0
    %v1713 = vpop.f32.mrb[0].mxu0
    %v1714 = vadd.f32 0.0, %v1713
    %v1715 = vpop.f32.mrb[0].mxu0
    %1716 = vdwg.mxu0
    %v1717 = vpack.c.bf16 %v1706, %v1703
    %v1718 = vpack.c.bf16 %v1714, %v1711
    %v1719 = vld [vmem:[#allocation4 + $0xc0] sm:$0xf]
    %v1720 = vld [vmem:[#allocation4 + $0xc4] sm:$0xf]
    %v1721 = vld [vmem:[#allocation4 + $0xc8] sm:$0xf]
    %v1722 = vld [vmem:[#allocation4 + $0xcc] sm:$0xf]
    %v1723 = vld [vmem:[#allocation4 + $0xd0] sm:$0xf]
    %v1724 = vld [vmem:[#allocation4 + $0xd4] sm:$0xf]
    %v1725 = vld [vmem:[#allocation4 + $0xd8] sm:$0xf]
    %v1726 = vld [vmem:[#allocation4 + $0xdc] sm:$0xf]
    %v1727 = vld [vmem:[#allocation4 + $0xe0] sm:$0xf]
    %v1728 = vld [vmem:[#allocation4 + $0xe4] sm:$0xf]
    %v1729 = vld [vmem:[#allocation4 + $0xe8] sm:$0xf]
    %v1730 = vld [vmem:[#allocation4 + $0xec] sm:$0xf]
    %v1731 = vld [vmem:[#allocation4 + $0xf0] sm:$0xf]
    %v1732 = vld [vmem:[#allocation4 + $0xf4] sm:$0xf]
    %v1733 = vld [vmem:[#allocation4 + $0xf8] sm:$0xf]
    %v1734 = vld [vmem:[#allocation4 + $0xfc] sm:$0xf]
    %v1735 = vld [vmem:[#allocation4 + $0x100] sm:$0xf]
    %v1736 = vld [vmem:[#allocation4 + $0x104] sm:$0xf]
    %v1737 = vld [vmem:[#allocation4 + $0x108] sm:$0xf]
    %v1738 = vld [vmem:[#allocation4 + $0x10c] sm:$0xf]
    %v1739 = vld [vmem:[#allocation4 + $0x110] sm:$0xf]
    %v1740 = vld [vmem:[#allocation4 + $0x114] sm:$0xf]
    %v1741 = vld [vmem:[#allocation4 + $0x118] sm:$0xf]
    %v1742 = vld [vmem:[#allocation4 + $0x11c] sm:$0xf]
    %v1743 = vld [vmem:[#allocation4 + $0x120] sm:$0xf]
    %v1744 = vld [vmem:[#allocation4 + $0x124] sm:$0xf]
    %v1745 = vld [vmem:[#allocation4 + $0x128] sm:$0xf]
    %v1746 = vld [vmem:[#allocation4 + $0x12c] sm:$0xf]
    %v1747 = vld [vmem:[#allocation4 + $0x130] sm:$0xf]
    %v1748 = vld [vmem:[#allocation4 + $0x134] sm:$0xf]
    %v1749 = vld [vmem:[#allocation4 + $0x138] sm:$0xf]
    %v1750 = vld [vmem:[#allocation4 + $0x13c] sm:$0xf]
    %v1783 = vunpack.c.l.b16 %v1719
    %v1784 = vunpack.c.l.b16 %v1720
    %v1785 = vunpack.c.l.b16 %v1721
    %v1786 = vunpack.c.l.b16 %v1722
    %v1787 = vunpack.c.l.b16 %v1723
    %v1788 = vunpack.c.l.b16 %v1724
    %v1789 = vunpack.c.l.b16 %v1725
    %v1790 = vunpack.c.l.b16 %v1726
    %v1791 = vunpack.c.l.b16 %v1727
    %v1792 = vunpack.c.l.b16 %v1728
    %v1793 = vunpack.c.l.b16 %v1729
    %v1794 = vunpack.c.l.b16 %v1730
    %v1795 = vunpack.c.l.b16 %v1731
    %v1796 = vunpack.c.l.b16 %v1732
    %v1797 = vunpack.c.l.b16 %v1733
    %v1798 = vunpack.c.l.b16 %v1734
    %v1799 = vunpack.c.l.b16 %v1735
    %v1800 = vunpack.c.l.b16 %v1736
    %v1801 = vunpack.c.l.b16 %v1737
    %v1802 = vunpack.c.l.b16 %v1738
    %v1803 = vunpack.c.l.b16 %v1739
    %v1804 = vunpack.c.l.b16 %v1740
    %v1805 = vunpack.c.l.b16 %v1741
    %v1806 = vunpack.c.l.b16 %v1742
    %v1807 = vunpack.c.l.b16 %v1743
    %v1808 = vunpack.c.l.b16 %v1744
    %v1809 = vunpack.c.l.b16 %v1745
    %v1810 = vunpack.c.l.b16 %v1746
    %v1811 = vunpack.c.l.b16 %v1747
    %v1812 = vunpack.c.l.b16 %v1748
    %v1813 = vunpack.c.l.b16 %v1749
    %v1814 = vunpack.c.l.b16 %v1750
    %v1815 = vpack.c.b16 %v1784, %v1783
    %v1816 = vpack.c.b16 %v1786, %v1785
    %v1817 = vpack.c.b16 %v1788, %v1787
    %v1818 = vpack.c.b16 %v1790, %v1789
    %v1819 = vpack.c.b16 %v1792, %v1791
    %v1820 = vpack.c.b16 %v1794, %v1793
    %v1821 = vpack.c.b16 %v1796, %v1795
    %v1822 = vpack.c.b16 %v1798, %v1797
    %v1823 = vpack.c.b16 %v1800, %v1799
    %v1824 = vpack.c.b16 %v1802, %v1801
    %v1825 = vpack.c.b16 %v1804, %v1803
    %v1826 = vpack.c.b16 %v1806, %v1805
    %v1827 = vpack.c.b16 %v1808, %v1807
    %v1828 = vpack.c.b16 %v1810, %v1809
    %v1829 = vpack.c.b16 %v1812, %v1811
    %v1830 = vpack.c.b16 %v1814, %v1813
    %1847 = vmatprep.subr.bf16.mxu0 0
    %1848 = vmatpush1.bf16.msra.mxu0 %v1815
    %1849 = vmatprep.subr.bf16.mxu0 0
    %1850 = vmatpush1.bf16.msra.mxu0 %v1816
    %1851 = vmatprep.subr.bf16.mxu0 0
    %1852 = vmatpush1.bf16.msra.mxu0 %v1817
    %1853 = vmatprep.subr.bf16.mxu0 0
    %1854 = vmatpush1.bf16.msra.mxu0 %v1818
    %1855 = vmatprep.subr.bf16.mxu0 0
    %1856 = vmatpush1.bf16.msra.mxu0 %v1819
    %1857 = vmatprep.subr.bf16.mxu0 0
    %1858 = vmatpush1.bf16.msra.mxu0 %v1820
    %1859 = vmatprep.subr.bf16.mxu0 0
    %1860 = vmatpush1.bf16.msra.mxu0 %v1821
    %1861 = vmatprep.subr.bf16.mxu0 0
    %1862 = vmatpush1.bf16.msra.mxu0 %v1822
    %1863 = vmatprep.subr.bf16.mxu0 0
    %1864 = vmatpush1.bf16.msra.mxu0 %v1823
    %1865 = vmatprep.subr.bf16.mxu0 0
    %1866 = vmatpush1.bf16.msra.mxu0 %v1824
    %1867 = vmatprep.subr.bf16.mxu0 0
    %1868 = vmatpush1.bf16.msra.mxu0 %v1825
    %1869 = vmatprep.subr.bf16.mxu0 0
    %1870 = vmatpush1.bf16.msra.mxu0 %v1826
    %1871 = vmatprep.subr.bf16.mxu0 0
    %1872 = vmatpush1.bf16.msra.mxu0 %v1827
    %1873 = vmatprep.subr.bf16.mxu0 0
    %1874 = vmatpush1.bf16.msra.mxu0 %v1828
    %1875 = vmatprep.subr.bf16.mxu0 0
    %1876 = vmatpush1.bf16.msra.mxu0 %v1829
    %1877 = vmatprep.subr.bf16.mxu0 0
    %1878 = vmatpush1.bf16.msra.mxu0 %v1830
    %1879 = vmatprep.mubr.bf16.mxu0 %v1717
    %1880 = vmatmul.mubr.bf16.gmra.mrb[0].mxu0 %v1538
    %v1881 = vpop.f32.mrb[0].mxu0
    %v1882 = vadd.f32 0.0, %v1881
    %v1883 = vpop.f32.mrb[0].mxu0
    %v1884 = vpop.f32.mrb[0].mxu0
    %v1885 = vadd.f32 0.0, %v1884
    %v1886 = vpop.f32.mrb[0].mxu0
    %1887 = vmatprep.mubr.bf16.mxu0 %v1718
    %1888 = vmatmul.mubr.bf16.gmra.mrb[0].mxu0 %v1539
    %v1889 = vpop.f32.mrb[0].mxu0
    %v1890 = vadd.f32 0.0, %v1889
    %v1891 = vpop.f32.mrb[0].mxu0
    %v1892 = vpop.f32.mrb[0].mxu0
    %v1893 = vadd.f32 0.0, %v1892
    %v1894 = vpop.f32.mrb[0].mxu0
    %1895 = vdwg.mxu0
    %v1896 = vld [vmem:[%s4 + $0x4] sm:$0x1]
    %v1897 = vld [vmem:[%s4 + $0x5] sm:$0x1]
    %v1898 = vadd.f32 %v1882, %v1885
    %v1899 = vadd.f32 %v1898, %v1890
    %v1900 = vadd.f32 %v1899, %v1893
    %v1901 = vrot.slane %v1900, 4
    %v1902 = vadd.f32 %v1900, %v1901
    %v1903 = vrot.slane %v1902, 2
    %v1904 = vadd.f32 %v1902, %v1903
    %v1905 = vrot.slane %v1904, 1
    %v1906 = vadd.f32 %v1904, %v1905
    %v1907 = vmul.f32 %v1906, %v821
    %v1908 = vsub.f32 %v1882, %v1907
    %v1909 = vsub.f32 %v1885, %v1907
    %v1910 = vsub.f32 %v1890, %v1907
    %v1911 = vsub.f32 %v1893, %v1907
    %v1912 = vmul.f32 %v1908, %v1908
    %v1913 = vmul.f32 %v1909, %v1909
    %v1914 = vmul.f32 %v1910, %v1910
    %v1915 = vmul.f32 %v1911, %v1911
    %v1916 = vadd.f32 %v1912, %v1913
    %v1917 = vadd.f32 %v1916, %v1914
    %v1918 = vadd.f32 %v1917, %v1915
    %v1919 = vrot.slane %v1918, 4
    %v1920 = vadd.f32 %v1918, %v1919
    %v1921 = vrot.slane %v1920, 2
    %v1922 = vadd.f32 %v1920, %v1921
    %v1923 = vrot.slane %v1922, 1
    %v1924 = vadd.f32 %v1922, %v1923
    %v1925 = vmul.f32 %v1924, %v821
    %v1926 = vlaneseq
    %v1927 = vshrl.u32 %v1926, 7
    %v1928 = vsub.s32 0, %v1927
    %v1929 = vrot.slane %v1896, %v1928
    %v1930 = vmul.f32 %v1929, %v1908
    %v1931 = vmul.f32 %v1929, %v1909
    %v1932 = vmul.f32 %v1929, %v1910
    %v1933 = vmul.f32 %v1929, %v1911
    %v1934 = vadd.f32 %v1925, 1.0
    %v1935 = vrsqrt.pop %v1934
    %v1936 = vmul.f32 %v1930, %v1935
    %v1937 = vmul.f32 %v1931, %v1935
    %v1938 = vmul.f32 %v1932, %v1935
    %v1939 = vmul.f32 %v1933, %v1935
    %v1940 = vlaneseq
    %v1941 = vshrl.u32 %v1940, 7
    %v1942 = vsub.s32 0, %v1941
    %v1943 = vrot.slane %v1897, %v1942
    %v1944 = vadd.f32 %v1936, %v1943
    %v1945 = vadd.f32 %v1937, %v1943
    %v1946 = vadd.f32 %v1938, %v1943
    %v1947 = vadd.f32 %v1939, %v1943
    %vm1948 = vcmp.gt.f32.partialorder %v1944, 0.0
    %vm1949 = vcmp.gt.f32.partialorder %v1945, 0.0
    %vm1950 = vcmp.gt.f32.partialorder %v1946, 0.0
    %vm1951 = vcmp.gt.f32.partialorder %v1947, 0.0
    %v1952 = vmul.f32 %v1944, 0.01
    %v1953 = vmul.f32 %v1945, 0.01
    %v1954 = vmul.f32 %v1946, 0.01
    %v1955 = vmul.f32 %v1947, 0.01
    %v1956 = vsel %vm1948, %v1944, %v1952
    %v1957 = vsel %vm1949, %v1945, %v1953
    %v1958 = vsel %vm1950, %v1946, %v1954
    %v1959 = vsel %vm1951, %v1947, %v1955
    %v1960 = vpack.c.bf16 %v1957, %v1956
    %v1961 = vpack.c.bf16 %v1959, %v1958
    %v1962 = vld [vmem:[%s5] sm:$0xf]
    %v1963 = vld [vmem:[%s5 + $0x4] sm:$0xf]
    %v1964 = vld [vmem:[%s5 + $0x8] sm:$0xf]
    %v1965 = vld [vmem:[%s5 + $0xc] sm:$0xf]
    %v1966 = vld [vmem:[%s5 + $0x10] sm:$0xf]
    %v1967 = vld [vmem:[%s5 + $0x14] sm:$0xf]
    %v1974 = vunpack.c.l.b16 %v1962
    %v1975 = vunpack.c.l.b16 %v1963
    %v1976 = vunpack.c.l.b16 %v1964
    %v1977 = vunpack.c.l.b16 %v1965
    %v1978 = vunpack.c.l.b16 %v1966
    %v1979 = vunpack.c.l.b16 %v1967
    %v1980 = vpack.c.b16 %v1975, %v1974
    %v1981 = vpack.c.b16 %v1977, %v1976
    %v1982 = vpack.c.b16 %v1979, %v1978
    %vm1983 = vcmask 261120
    %v1985 = vsel %vm1983, %v1980, 0
    %v1988 = vsel %vm1983, %v1981, 0
    %v1991 = vsel %vm1983, %v1982, 0
    %1993 = vmatprep.subr.bf16.mxu0 0
    %1994 = vmatpush1.bf16.msra.mxu0 %v1960
    %1995 = vmatprep.subr.bf16.mxu0 0
    %1996 = vmatpush1.bf16.msra.mxu0 %v1961
    %1997 = vmatprep.subr.bf16.mxu0 0
    %1998 = vmatpush1.bf16.msra.mxu0 0
    %1999 = vmatprep.subr.bf16.mxu0 0
    %2000 = vmatpush1.bf16.msra.mxu0 0
    %2001 = vmatprep.subr.bf16.mxu0 0
    %2002 = vmatpush1.bf16.msra.mxu0 0
    %2003 = vmatprep.subr.bf16.mxu0 0
    %2004 = vmatpush1.bf16.msra.mxu0 0
    %2005 = vmatprep.subr.bf16.mxu0 0
    %2006 = vmatpush1.bf16.msra.mxu0 0
    %2007 = vmatprep.subr.bf16.mxu0 0
    %2008 = vmatpush1.bf16.msra.mxu0 0
    %2009 = vmatprep.subr.bf16.mxu0 0
    %2010 = vmatpush1.bf16.msra.mxu0 0
    %2011 = vmatprep.subr.bf16.mxu0 0
    %2012 = vmatpush1.bf16.msra.mxu0 0
    %2013 = vmatprep.subr.bf16.mxu0 0
    %2014 = vmatpush1.bf16.msra.mxu0 0
    %2015 = vmatprep.subr.bf16.mxu0 0
    %2016 = vmatpush1.bf16.msra.mxu0 0
    %2017 = vmatprep.subr.bf16.mxu0 0
    %2018 = vmatpush1.bf16.msra.mxu0 0
    %2019 = vmatprep.subr.bf16.mxu0 0
    %2020 = vmatpush1.bf16.msra.mxu0 0
    %2021 = vmatprep.subr.bf16.mxu0 0
    %2022 = vmatpush1.bf16.msra.mxu0 0
    %2023 = vmatprep.subr.bf16.mxu0 0
    %2024 = vmatpush1.bf16.msra.mxu0 0
    %2025 = vmatprep.mubr.bf16.mxu0 0
    %2026 = vmatmul.mubr.bf16.gmra.mrb[0].mxu0 %v1985
    %v2027 = vpop.f32.mrb[0].mxu0
    %v2028 = vadd.f32 0.0, %v2027
    %v2029 = vpop.f32.mrb[0].mxu0
    %v2030 = vpop.f32.mrb[0].mxu0
    %v2031 = vadd.f32 0.0, %v2030
    %v2032 = vpop.f32.mrb[0].mxu0
    %2033 = vmatprep.mubr.bf16.mxu0 0
    %2034 = vmatmul.mubr.bf16.gmra.mrb[0].mxu0 %v1988
    %v2035 = vpop.f32.mrb[0].mxu0
    %v2036 = vadd.f32 0.0, %v2035
    %v2037 = vpop.f32.mrb[0].mxu0
    %v2038 = vpop.f32.mrb[0].mxu0
    %v2039 = vadd.f32 0.0, %v2038
    %v2040 = vpop.f32.mrb[0].mxu0
    %2041 = vmatprep.mubr.bf16.mxu0 0
    %2042 = vmatmul.mubr.bf16.gmra.mrb[0].mxu0 %v1991
    %v2043 = vpop.f32.mrb[0].mxu0
    %v2044 = vadd.f32 0.0, %v2043
    %v2045 = vpop.f32.mrb[0].mxu0
    %v2046 = vpop.f32.mrb[0].mxu0
    %v2047 = vadd.f32 0.0, %v2046
    %v2048 = vpop.f32.mrb[0].mxu0
    %2049 = vdwg.mxu0
    %v2050 = vld [vmem:[%s5 + $0x18] sm:$0xf]
    %v2051 = vld [vmem:[%s5 + $0x1c] sm:$0xf]
    %v2052 = vld [vmem:[%s5 + $0x20] sm:$0xf]
    %v2053 = vld [vmem:[%s5 + $0x24] sm:$0xf]
    %v2054 = vld [vmem:[%s5 + $0x28] sm:$0xf]
    %v2055 = vld [vmem:[%s5 + $0x2c] sm:$0xf]
    %v2062 = vunpack.c.l.b16 %v2050
    %v2063 = vunpack.c.l.b16 %v2051
    %v2064 = vunpack.c.l.b16 %v2052
    %v2065 = vunpack.c.l.b16 %v2053
    %v2066 = vunpack.c.l.b16 %v2054
    %v2067 = vunpack.c.l.b16 %v2055
    %v2068 = vpack.c.b16 %v2063, %v2062
    %v2069 = vpack.c.b16 %v2065, %v2064
    %v2070 = vpack.c.b16 %v2067, %v2066
    %v2072 = vsel %vm1983, %v2068, 0
    %v2075 = vsel %vm1983, %v2069, 0
    %v2078 = vsel %vm1983, %v2070, 0
    %2080 = vmatprep.subr.bf16.mxu0 0
    %2081 = vmatpush1.bf16.msra.mxu0 %v1960
    %2082 = vmatprep.subr.bf16.mxu0 0
    %2083 = vmatpush1.bf16.msra.mxu0 %v1961
    %2084 = vmatprep.subr.bf16.mxu0 0
    %2085 = vmatpush1.bf16.msra.mxu0 0
    %2086 = vmatprep.subr.bf16.mxu0 0
    %2087 = vmatpush1.bf16.msra.mxu0 0
    %2088 = vmatprep.subr.bf16.mxu0 0
    %2089 = vmatpush1.bf16.msra.mxu0 0
    %2090 = vmatprep.subr.bf16.mxu0 0
    %2091 = vmatpush1.bf16.msra.mxu0 0
    %2092 = vmatprep.subr.bf16.mxu0 0
    %2093 = vmatpush1.bf16.msra.mxu0 0
    %2094 = vmatprep.subr.bf16.mxu0 0
    %2095 = vmatpush1.bf16.msra.mxu0 0
    %2096 = vmatprep.subr.bf16.mxu0 0
    %2097 = vmatpush1.bf16.msra.mxu0 0
    %2098 = vmatprep.subr.bf16.mxu0 0
    %2099 = vmatpush1.bf16.msra.mxu0 0
    %2100 = vmatprep.subr.bf16.mxu0 0
    %2101 = vmatpush1.bf16.msra.mxu0 0
    %2102 = vmatprep.subr.bf16.mxu0 0
    %2103 = vmatpush1.bf16.msra.mxu0 0
    %2104 = vmatprep.subr.bf16.mxu0 0
    %2105 = vmatpush1.bf16.msra.mxu0 0
    %2106 = vmatprep.subr.bf16.mxu0 0
    %2107 = vmatpush1.bf16.msra.mxu0 0
    %2108 = vmatprep.subr.bf16.mxu0 0
    %2109 = vmatpush1.bf16.msra.mxu0 0
    %2110 = vmatprep.subr.bf16.mxu0 0
    %2111 = vmatpush1.bf16.msra.mxu0 0
    %2112 = vmatprep.mubr.bf16.mxu0 0
    %2113 = vmatmul.mubr.bf16.gmra.mrb[0].mxu0 %v2072
    %v2114 = vpop.f32.mrb[0].mxu0
    %v2115 = vadd.f32 0.0, %v2114
    %v2116 = vpop.f32.mrb[0].mxu0
    %v2117 = vpop.f32.mrb[0].mxu0
    %v2118 = vadd.f32 0.0, %v2117
    %v2119 = vpop.f32.mrb[0].mxu0
    %2120 = vmatprep.mubr.bf16.mxu0 0
    %2121 = vmatmul.mubr.bf16.gmra.mrb[0].mxu0 %v2075
    %v2122 = vpop.f32.mrb[0].mxu0
    %v2123 = vadd.f32 0.0, %v2122
    %v2124 = vpop.f32.mrb[0].mxu0
    %v2125 = vpop.f32.mrb[0].mxu0
    %v2126 = vadd.f32 0.0, %v2125
    %v2127 = vpop.f32.mrb[0].mxu0
    %2128 = vmatprep.mubr.bf16.mxu0 0
    %2129 = vmatmul.mubr.bf16.gmra.mrb[0].mxu0 %v2078
    %v2130 = vpop.f32.mrb[0].mxu0
    %v2131 = vadd.f32 0.0, %v2130
    %v2132 = vpop.f32.mrb[0].mxu0
    %v2133 = vpop.f32.mrb[0].mxu0
    %v2134 = vadd.f32 0.0, %v2133
    %v2135 = vpop.f32.mrb[0].mxu0
    %2136 = vdwg.mxu0
    %v2137 = vmul.f32 %v2028, %v2115
    %v2138 = vmul.f32 %v2031, %v2118
    %v2139 = vmul.f32 %v2036, %v2123
    %v2140 = vmul.f32 %v2039, %v2126
    %v2141 = vmul.f32 %v2044, %v2131
    %v2142 = vmul.f32 %v2047, %v2134
    %2143 = vadd.xlane.f32.xlu0 %v2137
    %v2144 = vpop.xlane.xlu0 %2143
    %2145 = vadd.xlane.f32.xlu0 %v2138
    %v2146 = vpop.xlane.xlu0 %2145
    %2147 = vadd.xlane.f32.xlu0 %v2139
    %v2148 = vpop.xlane.xlu0 %2147
    %2149 = vadd.xlane.f32.xlu0 %v2140
    %v2150 = vpop.xlane.xlu0 %2149
    %2151 = vadd.xlane.f32.xlu0 %v2141
    %v2152 = vpop.xlane.xlu0 %2151
    %2153 = vadd.xlane.f32.xlu0 %v2142
    %v2154 = vpop.xlane.xlu0 %2153
    %2155 = vst [vmem:[%s6] sm:$0xff] %v2144
    %2156 = vst [vmem:[%s6 + $0x8] sm:$0xff] %v2146
    %2157 = vst [vmem:[%s6 + $0x10] sm:$0xff] %v2148
    %2158 = vst [vmem:[%s6 + $0x18] sm:$0xff] %v2150
    %2159 = vst [vmem:[%s6 + $0x20] sm:$0xff] %v2152
    %2160 = vst [vmem:[%s6 + $0x28] sm:$0xff] %v2154
    // Predicated region
    $region34: #{forward.1} parent=1 // pred_check
      _
    $region35: #{forward.1} parent=1 // pred_check_branch
      %2162 = sbr.rel (0) target = $region37
    $region36: #{forward.1} parent=1 // pred_region
      _
    $region37: #{forward.1} parent=1 // pred_fallthru
      _
    // Predicated region
    $region38: #{forward.1} parent=1 // pred_check
      _
    $region39: #{forward.1} parent=1 // pred_check_branch
      %2164 = sbr.rel (0) target = $region41
    $region40: #{forward.1} parent=1 // pred_region
      _
    $region41: #{forward.1} parent=1 // pred_fallthru
      _
    %2165 = vsyncpa [#allocation3], 1
    %2166 = vsyncpa [#allocation5], 1

</llo_original>
